<compile_context>
chip_gen: v6e
topology: v6e:2x2x1
jax: 0.10.0
libtpu: 0.0.40
codegen_flags: <defaults>
</compile_context>

<pallas_src>
import functools

import jax
import jax.numpy as jnp
from jax.experimental import pallas as pl
from jax.experimental.pallas import tpu as pltpu


def _compute_vmem_limit():
    # ~3/4 of physical VMEM: 96 MiB on v5e/v6e (128 MiB), 48 MiB on v7x (64 MiB).
    try:
        info = pltpu.get_tpu_info()
        cap = getattr(info, "vmem_capacity_bytes", None)
        if cap:
            return int(cap) * 3 // 4
    except Exception:
        pass
    return 32 * 1024 * 1024


_VMEM_LIMIT = _compute_vmem_limit()
_VMEM_SPEC = pl.BlockSpec(memory_space=pltpu.MemorySpace.VMEM)
_SMEM_SPEC = pl.BlockSpec(memory_space=pltpu.MemorySpace.SMEM)


def _f32dot(a, b):
    return jnp.dot(a, b, preferred_element_type=jnp.float32)


def _round_up(n, m):
    return ((n + m - 1) // m) * m


def _row_grid(n, max_blk=128):
    blk = min(_round_up(n, 8), max_blk)
    padded = _round_up(n, blk)
    return padded, blk


def _pad_rows(x, padded):
    return jnp.pad(x, ((0, padded - x.shape[0]), (0, 0)))


def _largest_divisor(n, cap=8):
    for g in range(min(n, cap), 0, -1):
        if n % g == 0:
            return g
    return 1


def _full_spec(shape):
    return pl.BlockSpec(tuple(shape), lambda i: tuple(0 for _ in shape))


def _row_spec(blk, width):
    return pl.BlockSpec((blk, width), lambda i: (i, 0))


# --------------------------------------------------------------------------------------
# Fused GraphEncoder kernel: n_layers x (GINEConv + learnable SkipConnection), streaming
# per-layer writes into the output (no in-kernel concat).
# --------------------------------------------------------------------------------------
def _encoder_kernel(has_transform, in_dim, hid, *refs):
    x_ref, soh_ref, doh_ref, ea_ref, alpha_ref = refs[:5]
    o_ref = refs[-1]
    prm = refs[5:-1]

    soh = soh_ref[...]          # bf16 one-hot gather  [E, N]
    doh = doh_ref[...]          # bf16 one-hot scatter [E, N] (never transposed/materialized)
    ea = ea_ref[...]
    x_cur = x_ref[...]
    o_ref[:, 0:in_dim] = x_cur
    off = in_dim
    i = 0
    for l, ht in enumerate(has_transform):
        we, be, w1, b1, w2, b2 = prm[i:i + 6]
        i += 6
        if ht:
            ws, bs = prm[i:i + 2]
            i += 2
        alpha = alpha_ref[l]                                             # scalar from SMEM
        # GINEConv: msg = relu(x_src + Linear(edge_attr)); agg = scatter_add(dst, msg)
        # gather/scatter as bf16 one-hot matmuls (native bf16 MXU; x/msg rounded to bf16)
        gathered = _f32dot(soh, x_cur.astype(jnp.bfloat16))              # [E, C]
        e_emb = _f32dot(ea, we[...]) + be[...]                           # GINE edge lin
        msg = jnp.maximum(gathered + e_emb, 0.0)
        agg = jax.lax.dot_general(doh, msg.astype(jnp.bfloat16),         # contract edge axis
                                  (((0,), (0,)), ((), ())),
                                  preferred_element_type=jnp.float32)    # [N, C]
        h = jnp.maximum(_f32dot(x_cur + agg, w1[...]) + b1[...], 0.0)
        x_new = _f32dot(h, w2[...]) + b2[...]
        if ht:
            x_skip = _f32dot(x_cur, ws[...]) + bs[...]
        else:
            x_skip = x_cur                                               # nn.Identity path
        x_cur = alpha * x_skip + (1.0 - alpha) * x_new
        o_ref[:, off:off + hid] = x_cur
        off += hid


def graph_encoder(enc_params, x, soh, doh, edge_attr):
    layers = enc_params["layers"]
    n, in_dim = x.shape
    hid = layers[0]["w1"].shape[1]
    out_dim = in_dim + len(layers) * hid
    has_transform = tuple("ws" in lp for lp in layers)
    args = [x, soh, doh, edge_attr, enc_params["alpha"]]
    for lp in layers:
        args += [lp["we"], lp["be"], lp["w1"], lp["b1"], lp["w2"], lp["b2"]]
        if "ws" in lp:
            args += [lp["ws"], lp["bs"]]
    in_specs = [_VMEM_SPEC] * 4 + [_SMEM_SPEC] + [_VMEM_SPEC] * (len(args) - 5)
    # TODO(synk): the whole graph stays in VMEM (message passing couples all nodes); for very
    #             large graphs a scalar-prefetch/edge-tiled formulation would be needed.
    return pl.pallas_call(
        functools.partial(_encoder_kernel, has_transform, in_dim, hid),
        out_shape=jax.ShapeDtypeStruct((n, out_dim), jnp.float32),
        in_specs=in_specs,
        compiler_params=pltpu.CompilerParams(vmem_limit_bytes=_VMEM_LIMIT),
    )(*args)


# --------------------------------------------------------------------------------------
# AtomMapper: masked softmax + sinkhorn normalization (G graphs per grid step)
# --------------------------------------------------------------------------------------
def _match_kernel(n_iters, hp_ref, hr_ref, mp_ref, mr_ref, o_ref):
    hp = hp_ref[...]                   # [G, Np, D]
    hr = hr_ref[...]                   # [G, Nr, D]
    mp = mp_ref[...]                   # [G, Np, 1]
    mr = mr_ref[...]                   # [G, 1, Nr]
    m_hat = jnp.einsum("gpd,grd->gpr", hp, hr, preferred_element_type=jnp.float32)
    valid = mp * mr
    logits = jnp.where(valid > 0.0, m_hat, -1e30)
    logits = logits - jnp.max(logits, axis=-1, keepdims=True)
    e = jnp.exp(logits) * valid
    p = e / jnp.maximum(jnp.sum(e, axis=-1, keepdims=True), 1e-30)
    # TODO(synk): `sinkhorn` is not defined in the reference source; standard iterative
    #             row/column renormalization (exact division) is used; padded entries stay 0.
    for _ in range(n_iters):
        p = p / jnp.maximum(jnp.sum(p, axis=-1, keepdims=True), 1e-8)
        p = p / jnp.maximum(jnp.sum(p, axis=-2, keepdims=True), 1e-8)
    o_ref[...] = p


def masked_match_sinkhorn(hp_dense, hr_dense, mask_p, mask_r, n_iters=5):
    b, np_, d = hp_dense.shape
    nr = hr_dense.shape[1]
    g = _largest_divisor(b)
    mp = mask_p.astype(jnp.float32)[:, :, None]
    mr = mask_r.astype(jnp.float32)[:, None, :]
    return pl.pallas_call(
        functools.partial(_match_kernel, n_iters),
        grid=(b // g,),
        in_specs=[
            pl.BlockSpec((g, np_, d), lambda i: (i, 0, 0)),
            pl.BlockSpec((g, nr, d), lambda i: (i, 0, 0)),
            pl.BlockSpec((g, np_, 1), lambda i: (i, 0, 0)),
            pl.BlockSpec((g, 1, nr), lambda i: (i, 0, 0)),
        ],
        out_specs=pl.BlockSpec((g, np_, nr), lambda i: (i, 0, 0)),
        out_shape=jax.ShapeDtypeStruct((b, np_, nr), jnp.float32),
        compiler_params=pltpu.CompilerParams(dimension_semantics=("parallel",),
                                             vmem_limit_bytes=_VMEM_LIMIT),
    )(hp_dense, hr_dense, mp, mr)


# --------------------------------------------------------------------------------------
# Row-gridded linear kernels (lane-dense QKV projections on flat node arrays)
# --------------------------------------------------------------------------------------
def _linear_kernel(x_ref, w_ref, b_ref, o_ref):
    o_ref[...] = _f32dot(x_ref[...], w_ref[...]) + b_ref[...]


def _linear2_kernel(x_ref, wa_ref, ba_ref, wb_ref, bb_ref, oa_ref, ob_ref):
    x = x_ref[...]
    oa_ref[...] = _f32dot(x, wa_ref[...]) + ba_ref[...]
    ob_ref[...] = _f32dot(x, wb_ref[...]) + bb_ref[...]


def linear_rows(x, w, b):
    n, din = x.shape
    dout = w.shape[1]
    padded, blk = _row_grid(n)
    out = pl.pallas_call(
        _linear_kernel,
        grid=(padded // blk,),
        in_specs=[_row_spec(blk, din), _full_spec(w.shape), _full_spec(b.shape)],
        out_specs=_row_spec(blk, dout),
        out_shape=jax.ShapeDtypeStruct((padded, dout), jnp.float32),
        compiler_params=pltpu.CompilerParams(dimension_semantics=("parallel",),
                                             vmem_limit_bytes=_VMEM_LIMIT),
    )(_pad_rows(x, padded), w, b)
    return out[:n]


def linear2_rows(x, wa, ba, wb, bb):
    n, din = x.shape
    da, db = wa.shape[1], wb.shape[1]
    padded, blk = _row_grid(n)
    oa, ob = pl.pallas_call(
        _linear2_kernel,
        grid=(padded // blk,),
        in_specs=[_row_spec(blk, din), _full_spec(wa.shape), _full_spec(ba.shape),
                  _full_spec(wb.shape), _full_spec(bb.shape)],
        out_specs=(_row_spec(blk, da), _row_spec(blk, db)),
        out_shape=(jax.ShapeDtypeStruct((padded, da), jnp.float32),
                   jax.ShapeDtypeStruct((padded, db), jnp.float32)),
        compiler_params=pltpu.CompilerParams(dimension_semantics=("parallel",),
                                             vmem_limit_bytes=_VMEM_LIMIT),
    )(_pad_rows(x, padded), wa, ba, wb, bb)
    return oa[:n], ob[:n]


# --------------------------------------------------------------------------------------
# GuidedCrossAttention: attention only (projections already applied flat & lane-dense);
# G graphs per grid step, lane-dense [b, Np, D] output written head-slice by head-slice.
# --------------------------------------------------------------------------------------
def _gca_attn_kernel(heads, hd, scale, q_ref, k_ref, v_ref, mk_ref, o_ref):
    q = q_ref[...]                     # [G, Np, D]
    k = k_ref[...]
    v = v_ref[...]
    mk = mk_ref[...]                   # [G, 1, Np] key-validity mask
    for h in range(heads):
        sl = slice(h * hd, (h + 1) * hd)
        attn = jnp.einsum("gqe,gke->gqk", q[:, :, sl], k[:, :, sl],
                          preferred_element_type=jnp.float32) * scale
        # TODO(synk): a query row whose graph has all keys masked gets uniform weights here
        #             (reference yields NaN); those are padded rows dropped downstream.
        attn = jnp.where(mk > 0.0, attn, -1e30)
        attn = attn - jnp.max(attn, axis=-1, keepdims=True)
        ew = jnp.exp(attn)
        w = ew / jnp.sum(ew, axis=-1, keepdims=True)
        o_ref[:, :, sl] = jnp.einsum("gqk,gke->gqe", w, v[:, :, sl],
                                     preferred_element_type=jnp.float32)


def guided_cross_attention(q_dense, k_mapped, v_mapped, mask_p, heads):
    b, np_, d = q_dense.shape
    hd = d // heads
    scale = hd ** (-0.5)
    g = _largest_divisor(b)
    mk = mask_p.astype(jnp.float32)[:, None, :]
    blk3 = lambda last: pl.BlockSpec((g, np_, last), lambda i: (i, 0, 0))
    return pl.pallas_call(
        functools.partial(_gca_attn_kernel, heads, hd, scale),
        grid=(b // g,),
        in_specs=[blk3(d), blk3(d), blk3(d),
                  pl.BlockSpec((g, 1, np_), lambda i: (i, 0, 0))],
        out_specs=blk3(d),
        out_shape=jax.ShapeDtypeStruct((b, np_, d), jnp.float32),
        compiler_params=pltpu.CompilerParams(dimension_semantics=("parallel",),
                                             vmem_limit_bytes=_VMEM_LIMIT),
    )(q_dense, k_mapped, v_mapped, mk)


# --------------------------------------------------------------------------------------
# Fused fusion-MLP + AtomReactivityPredictor (row-gridded)
# --------------------------------------------------------------------------------------
def _fusion_arp_kernel(hp_ref, att_ref, fw1a_ref, fw1b_ref, fb1_ref, fw2_ref, fb2_ref,
                       aw1_ref, ab1_ref, aw2_ref, ab2_ref, aw3_ref, ab3_ref,
                       hfin_ref, logit_ref):
    # fusion: relu(Linear(concat[h_p, attn])) -> Linear   (concat realized as split matmul)
    h = _f32dot(hp_ref[...], fw1a_ref[...]) + _f32dot(att_ref[...], fw1b_ref[...]) + fb1_ref[...]
    h = jnp.maximum(h, 0.0)
    h_fin = _f32dot(h, fw2_ref[...]) + fb2_ref[...]
    hfin_ref[...] = h_fin
    # atom reactivity head: silu, silu, linear
    a = _f32dot(h_fin, aw1_ref[...]) + ab1_ref[...]
    a = a * jax.nn.sigmoid(a)
    a = _f32dot(a, aw2_ref[...]) + ab2_ref[...]
    a = a * jax.nn.sigmoid(a)
    logit_ref[...] = _f32dot(a, aw3_ref[...]) + ab3_ref[...]


def fusion_arp(h_p, attn_flat, fusion_p, arp_p):
    n, d = h_p.shape
    padded, blk = _row_grid(n)
    fw1a = fusion_p["w1"][:d]
    fw1b = fusion_p["w1"][d:]
    weights = [fw1a, fw1b, fusion_p["b1"], fusion_p["w2"], fusion_p["b2"],
               arp_p["w1"], arp_p["b1"], arp_p["w2"], arp_p["b2"], arp_p["w3"], arp_p["b3"]]
    h_fin, logit = pl.pallas_call(
        _fusion_arp_kernel,
        grid=(padded // blk,),
        in_specs=[_row_spec(blk, d), _row_spec(blk, d)] + [_full_spec(w.shape) for w in weights],
        out_specs=(_row_spec(blk, d), _row_spec(blk, 1)),
        out_shape=(jax.ShapeDtypeStruct((padded, d), jnp.float32),
                   jax.ShapeDtypeStruct((padded, 1), jnp.float32)),
        compiler_params=pltpu.CompilerParams(dimension_semantics=("parallel",),
                                             vmem_limit_bytes=_VMEM_LIMIT),
    )(_pad_rows(h_p, padded), _pad_rows(attn_flat, padded), *weights)
    return h_fin[:n], logit[:n]


# --------------------------------------------------------------------------------------
# Fused BondEmbedding + dual-graph predictor + bond head (row-gridded over edges)
# --------------------------------------------------------------------------------------
def _bond_kernel(hsrc_ref, hdst_ref, e_ref, dual_ref, asrc_ref, adst_ref,
                 ew1, eb1, eg1, et1, ew2, eb2, eg2, et2, ew3, eb3, eg3, et3,
                 dw1, db1, dw2, db2, dw3, db3,
                 bw1s, bw1d, bw1e, bw1p, bw1as, bw1ad, bb1, bw2, bb2, bwo, bbo,
                 o_ref):
    def ln_silu(y, g, bt):           # LayerNorm(eps=1e-5) + SiLU (Dropout = id in eval)
        mu = jnp.mean(y, axis=-1, keepdims=True)
        var = jnp.mean((y - mu) ** 2, axis=-1, keepdims=True)
        yn = (y - mu) * jax.lax.rsqrt(var + 1e-5) * g[...] + bt[...]
        return yn * jax.nn.sigmoid(yn)

    # bond embedding (3 x Linear+LN+SiLU)
    e = ln_silu(_f32dot(e_ref[...], ew1[...]) + eb1[...], eg1, et1)
    e = ln_silu(_f32dot(e, ew2[...]) + eb2[...], eg2, et2)
    e = ln_silu(_f32dot(e, ew3[...]) + eb3[...], eg3, et3)

    # dual-graph bond reactivity
    d = _f32dot(dual_ref[...], dw1[...]) + db1[...]
    d = d * jax.nn.sigmoid(d)
    d = _f32dot(d, dw2[...]) + db2[...]
    d = d * jax.nn.sigmoid(d)
    dprob = jax.nn.sigmoid(_f32dot(d, dw3[...]) + db3[...])              # [blk, 1]

    # bond head fc1 as split matmul over concat [h_src, h_dst, e, dprob, a_src, a_dst]
    xb = (_f32dot(hsrc_ref[...], bw1s[...])
          + _f32dot(hdst_ref[...], bw1d[...])
          + _f32dot(e, bw1e[...])
          + dprob * bw1p[...]
          + asrc_ref[...] * bw1as[...]
          + adst_ref[...] * bw1ad[...]
          + bb1[...])
    xb = xb * jax.nn.sigmoid(xb)
    xb = _f32dot(xb, bw2[...]) + bb2[...]
    xb = xb * jax.nn.sigmoid(xb)
    o_ref[...] = _f32dot(xb, bwo[...]) + bbo[...]


def bond_predictor(h_src, h_dst, edge_attr, dual_emb, a_src, a_dst, bp):
    e_cnt = edge_attr.shape[0]
    d = h_src.shape[1]
    eh = bp["be"][0]["w"].shape[1]
    padded, blk = _row_grid(e_cnt)
    w1 = bp["w1"]
    bw1s, bw1d, bw1e = w1[:d], w1[d:2 * d], w1[2 * d:2 * d + eh]
    bw1p = w1[2 * d + eh:2 * d + eh + 1]
    bw1as = w1[2 * d + eh + 1:2 * d + eh + 2]
    bw1ad = w1[2 * d + eh + 2:2 * d + eh + 3]
    row_args = [h_src, h_dst, edge_attr, dual_emb, a_src, a_dst]
    weights = []
    for blk_p in bp["be"]:
        weights += [blk_p["w"], blk_p["b"], blk_p["gamma"], blk_p["beta"]]
    dd = bp["dual"]
    weights += [dd["w1"], dd["b1"], dd["w2"], dd["b2"], dd["w3"], dd["b3"]]
    weights += [bw1s, bw1d, bw1e, bw1p, bw1as, bw1ad,
                bp["b1"], bp["w2"], bp["b2"], bp["wo"], bp["bo"]]
    in_specs = ([_row_spec(blk, a.shape[1]) for a in row_args]
                + [_full_spec(w.shape) for w in weights])
    out = pl.pallas_call(
        _bond_kernel,
        grid=(padded // blk,),
        in_specs=in_specs,
        out_specs=_row_spec(blk, 1),
        out_shape=jax.ShapeDtypeStruct((padded, 1), jnp.float32),
        compiler_params=pltpu.CompilerParams(dimension_semantics=("parallel",),
                                             vmem_limit_bytes=_VMEM_LIMIT),
    )(*[_pad_rows(a, padded) for a in row_args], *weights)
    return out[:e_cnt]


# --------------------------------------------------------------------------------------
# Glue (plain JAX): params, to_dense_batch, ARC forward
# --------------------------------------------------------------------------------------
def init_linear_params(key, fan_in, fan_out):
    kw, kb = jax.random.split(key)
    bound = 1.0 / (fan_in ** 0.5)
    w = jax.random.uniform(kw, (fan_in, fan_out), jnp.float32, -bound, bound)
    b = jax.random.uniform(kb, (1, fan_out), jnp.float32, -bound, bound)
    return w, b


def init_encoder(key, in_dim, hidden_dim, edge_dim, n_layers):
    layers = []
    c = in_dim
    for _ in range(n_layers):
        key, k0, k1, k2, k3 = jax.random.split(key, 5)
        we, be = init_linear_params(k0, edge_dim, c)            # GINE edge lin: edge_dim -> C_in
        w1, b1 = init_linear_params(k1, c, hidden_dim)
        w2, b2 = init_linear_params(k2, hidden_dim, hidden_dim)
        layer = dict(we=we, be=be, w1=w1, b1=b1, w2=w2, b2=b2)
        if c != hidden_dim:                                     # SkipConnection.transform
            ws, bs = init_linear_params(k3, c, hidden_dim)
            layer["ws"], layer["bs"] = ws, bs
        layers.append(layer)
        c = hidden_dim
    # alpha = 1.0 per layer, matching nn.Parameter(torch.ones(1)) in the reference
    return dict(layers=layers, alpha=jnp.ones((n_layers,), jnp.float32))


def init_arc_params(key, input_dim, hidden_dim, edge_attr_dim, edge_hidden_dim,
                    dual_edge_attr_dim, n_layers):
    final_dim = input_dim + n_layers * hidden_dim
    dual_input_dim = edge_attr_dim
    dual_final_dim = dual_input_dim + n_layers * hidden_dim
    keys = iter(jax.random.split(key, 32))
    p = {}
    p["enc"] = init_encoder(next(keys), input_dim, hidden_dim, edge_attr_dim, n_layers)
    p["dual_enc"] = init_encoder(next(keys), dual_input_dim, hidden_dim, dual_edge_attr_dim, n_layers)
    p["mapper_enc"] = init_encoder(next(keys), input_dim, hidden_dim, edge_attr_dim, n_layers)
    wq, bq = init_linear_params(next(keys), final_dim, final_dim)
    wk, bk = init_linear_params(next(keys), final_dim, final_dim)
    wv, bv = init_linear_params(next(keys), final_dim, final_dim)
    p["gca"] = dict(wq=wq, bq=bq, wk=wk, bk=bk, wv=wv, bv=bv)
    fw1, fb1 = init_linear_params(next(keys), 2 * final_dim, final_dim)
    fw2, fb2 = init_linear_params(next(keys), final_dim, final_dim)
    p["fusion"] = dict(w1=fw1, b1=fb1, w2=fw2, b2=fb2)
    aw1, ab1 = init_linear_params(next(keys), final_dim, 512)
    aw2, ab2 = init_linear_params(next(keys), 512, 512)
    aw3, ab3 = init_linear_params(next(keys), 512, 1)
    p["arp"] = dict(w1=aw1, b1=ab1, w2=aw2, b2=ab2, w3=aw3, b3=ab3)
    be_layers = []
    for din, dout in [(edge_attr_dim, edge_hidden_dim),
                      (edge_hidden_dim, edge_hidden_dim),
                      (edge_hidden_dim, edge_hidden_dim)]:
        w, b = init_linear_params(next(keys), din, dout)
        be_layers.append(dict(w=w, b=b,
                              gamma=jnp.ones((1, dout), jnp.float32),
                              beta=jnp.zeros((1, dout), jnp.float32)))
    dw1, db1 = init_linear_params(next(keys), dual_final_dim, hidden_dim)
    dw2, db2 = init_linear_params(next(keys), hidden_dim, hidden_dim)
    dw3, db3 = init_linear_params(next(keys), hidden_dim, 1)
    bw1, bb1 = init_linear_params(next(keys), 2 * final_dim + edge_hidden_dim + 3, hidden_dim)
    bw2, bb2 = init_linear_params(next(keys), hidden_dim, hidden_dim)
    bwo, bbo = init_linear_params(next(keys), hidden_dim, 1)
    p["bond"] = dict(be=be_layers,
                     dual=dict(w1=dw1, b1=db1, w2=dw2, b2=db2, w3=dw3, b3=db3),
                     w1=bw1, b1=bb1, w2=bw2, b2=bb2, wo=bwo, bo=bbo)
    return p


def to_dense_batch(x, batch, num_graphs, max_nodes):
    n = x.shape[0]
    counts = jnp.zeros((num_graphs,), jnp.int32).at[batch].add(1)
    offsets = jnp.cumsum(counts) - counts
    pos = jnp.arange(n) - offsets[batch]
    dense = jnp.zeros((num_graphs, max_nodes) + x.shape[1:], x.dtype).at[batch, pos].set(x)
    mask = jnp.zeros((num_graphs, max_nodes), bool).at[batch, pos].set(True)
    return dense, mask, pos


def arc_forward(params, data, n_heads):
    x_p, x_r = data["x_p"], data["x_r"]
    batch_p, batch_r = data["batch_p"], data["batch_r"]
    src_p, dst_p = data["edge_index_p"]
    src_r, dst_r = data["edge_index_r"]
    dsrc, ddst = data["dual_edge_index_p"]
    ea_p, ea_r = data["edge_attr_p"], data["edge_attr_r"]
    b, np_max, nr_max = data["num_graphs"], data["np_max"], data["nr_max"]
    n_p, n_r, n_dual = x_p.shape[0], x_r.shape[0], ea_p.shape[0]

    # bf16 one-hot gather/scatter operators (exact 0/1; node/msg data cast to bf16 in-kernel)
    soh_p = jax.nn.one_hot(src_p, n_p, dtype=jnp.bfloat16)
    doh_p = jax.nn.one_hot(dst_p, n_p, dtype=jnp.bfloat16)
    soh_r = jax.nn.one_hot(src_r, n_r, dtype=jnp.bfloat16)
    doh_r = jax.nn.one_hot(dst_r, n_r, dtype=jnp.bfloat16)
    soh_d = jax.nn.one_hot(dsrc, n_dual, dtype=jnp.bfloat16)
    doh_d = jax.nn.one_hot(ddst, n_dual, dtype=jnp.bfloat16)

    # shared product/reactant encoder, dual-graph encoder, mapper encoder (each 1 fused kernel)
    h_p = graph_encoder(params["enc"], x_p, soh_p, doh_p, ea_p)
    h_r = graph_encoder(params["enc"], x_r, soh_r, doh_r, ea_r)
    dual_node_emb = graph_encoder(params["dual_enc"], ea_p, soh_d, doh_d, data["dual_edge_attr_p"])
    hm_p = graph_encoder(params["mapper_enc"], x_p, soh_p, doh_p, ea_p)
    hm_r = graph_encoder(params["mapper_enc"], x_r, soh_r, doh_r, ea_r)

    # atom mapper: dense batch -> masked softmax + sinkhorn (Pallas, G graphs per grid step)
    hm_p_d, mask_mp, _ = to_dense_batch(hm_p, batch_p, b, np_max)
    hm_r_d, mask_mr, _ = to_dense_batch(hm_r, batch_r, b, nr_max)
    soft_matching = masked_match_sinkhorn(hm_p_d, hm_r_d, mask_mp, mask_mr)

    # guided cross attention (ground-truth mapping path): lane-dense flat QKV projections,
    # then dense batch / mapping gather in plain JAX, then batched attention kernel.
    # TODO(synk): get_symmetry_aware_atom_mapping is not needed on the ground-truth path.
    gca = params["gca"]
    q_flat = linear_rows(h_p, gca["wq"], gca["bq"])
    k_flat, v_flat = linear2_rows(h_r, gca["wk"], gca["bk"], gca["wv"], gca["bv"])

    q_d, mask_p, pos_p = to_dense_batch(q_flat, batch_p, b, np_max)
    k_d, _, _ = to_dense_batch(k_flat, batch_r, b, nr_max)
    v_d, _, _ = to_dense_batch(v_flat, batch_r, b, nr_max)
    map_d, _, _ = to_dense_batch(data["mapping_matrix"], batch_p, b, np_max)
    map_d = jnp.clip(map_d, 0, nr_max - 1)       # padded rows point at index 0; dropped below
    d_fin = q_d.shape[-1]
    idx = jnp.broadcast_to(map_d[:, :, None], (b, np_max, d_fin))
    k_mapped = jnp.take_along_axis(k_d, idx, axis=1)
    v_mapped = jnp.take_along_axis(v_d, idx, axis=1)
    attn_out = guided_cross_attention(q_d, k_mapped, v_mapped, mask_p, n_heads)  # [b,Np,D]
    attn_flat = attn_out[batch_p, pos_p]          # valid product rows, flat node order

    # fused fusion MLP + atom reactivity head (row-gridded)
    h_fin, atom_logits = fusion_arp(h_p, attn_flat, params["fusion"], params["arp"])
    atom_logits = atom_logits[:, 0]

    # fused bond reactivity predictor (row-gridded over edges)
    atom_probs = jax.nn.sigmoid(atom_logits)
    a_src = atom_probs[src_p][:, None]
    a_dst = atom_probs[dst_p][:, None]
    bond_logits = bond_predictor(h_fin[src_p], h_fin[dst_p], ea_p, dual_node_emb,
                                 a_src, a_dst, params["bond"])[:, 0]

    return soft_matching, atom_logits, bond_logits


# --------------------------------------------------------------------------------------
if __name__ == "__main__":
    key = jax.random.PRNGKey(0)
    input_dim, hidden_dim = 12, 16
    edge_attr_dim, edge_hidden_dim, dual_edge_attr_dim = 8, 16, 4
    n_heads, n_layers = 2, 3

    k_param, k_data = jax.random.split(key)
    params = init_arc_params(k_param, input_dim, hidden_dim, edge_attr_dim,
                             edge_hidden_dim, dual_edge_attr_dim, n_layers)

    # synthetic batch of 2 product graphs (5 & 4 nodes) and 2 reactant graphs (6 & 5 nodes)
    ks = jax.random.split(k_data, 16)
    batch_p = jnp.array([0] * 5 + [1] * 4, jnp.int32)
    batch_r = jnp.array([0] * 6 + [1] * 5, jnp.int32)
    x_p = jax.random.normal(ks[0], (9, input_dim), jnp.float32)
    x_r = jax.random.normal(ks[1], (11, input_dim), jnp.float32)
    src_p = jnp.concatenate([jax.random.randint(ks[2], (6,), 0, 5),
                             jax.random.randint(ks[3], (6,), 5, 9)])
    dst_p = jnp.concatenate([jax.random.randint(ks[4], (6,), 0, 5),
                             jax.random.randint(ks[5], (6,), 5, 9)])
    edge_index_p = jnp.stack([src_p, dst_p])
    edge_attr_p = jax.random.normal(ks[6], (12, edge_attr_dim), jnp.float32)
    src_r = jnp.concatenate([jax.random.randint(ks[7], (7,), 0, 6),
                             jax.random.randint(ks[8], (7,), 6, 11)])
    dst_r = jnp.concatenate([jax.random.randint(ks[9], (7,), 0, 6),
                             jax.random.randint(ks[10], (7,), 6, 11)])
    edge_index_r = jnp.stack([src_r, dst_r])
    edge_attr_r = jax.random.normal(ks[11], (14, edge_attr_dim), jnp.float32)
    dual_edge_index_p = jnp.stack([jax.random.randint(ks[12], (16,), 0, 12),
                                   jax.random.randint(ks[13], (16,), 0, 12)])
    dual_edge_attr_p = jax.random.normal(ks[14], (16, dual_edge_attr_dim), jnp.float32)
    mapping_matrix = jax.random.randint(ks[15], (9,), 0, 6)

    data = dict(x_p=x_p, x_r=x_r, batch_p=batch_p, batch_r=batch_r,
                edge_index_p=edge_index_p, edge_attr_p=edge_attr_p,
                edge_index_r=edge_index_r, edge_attr_r=edge_attr_r,
                dual_edge_index_p=dual_edge_index_p, dual_edge_attr_p=dual_edge_attr_p,
                mapping_matrix=mapping_matrix, num_graphs=2, np_max=5, nr_max=6)

    soft_matching, atom_logits, bond_logits = arc_forward(params, data, n_heads)
    jax.block_until_ready((soft_matching, atom_logits, bond_logits))
    assert soft_matching.shape == (2, 5, 6)
    assert atom_logits.shape == (9,)
    assert bond_logits.shape == (12,)
    print("KERNEL_OK")
</pallas_src>

<mosaic_0001>
module attributes {stable_mosaic.version = 11 : i64} {
  func.func @_encoder_kernel(%arg0: memref<9x12xf32, #tpu.memory_space<vmem>>, %arg1: memref<12x9xbf16, #tpu.memory_space<vmem>>, %arg2: memref<12x9xbf16, #tpu.memory_space<vmem>>, %arg3: memref<12x8xf32, #tpu.memory_space<vmem>>, %arg4: memref<3xf32, #tpu.memory_space<smem>>, %arg5: memref<8x12xf32, #tpu.memory_space<vmem>>, %arg6: memref<1x12xf32, #tpu.memory_space<vmem>>, %arg7: memref<12x16xf32, #tpu.memory_space<vmem>>, %arg8: memref<1x16xf32, #tpu.memory_space<vmem>>, %arg9: memref<16x16xf32, #tpu.memory_space<vmem>>, %arg10: memref<1x16xf32, #tpu.memory_space<vmem>>, %arg11: memref<12x16xf32, #tpu.memory_space<vmem>>, %arg12: memref<1x16xf32, #tpu.memory_space<vmem>>, %arg13: memref<8x16xf32, #tpu.memory_space<vmem>>, %arg14: memref<1x16xf32, #tpu.memory_space<vmem>>, %arg15: memref<16x16xf32, #tpu.memory_space<vmem>>, %arg16: memref<1x16xf32, #tpu.memory_space<vmem>>, %arg17: memref<16x16xf32, #tpu.memory_space<vmem>>, %arg18: memref<1x16xf32, #tpu.memory_space<vmem>>, %arg19: memref<8x16xf32, #tpu.memory_space<vmem>>, %arg20: memref<1x16xf32, #tpu.memory_space<vmem>>, %arg21: memref<16x16xf32, #tpu.memory_space<vmem>>, %arg22: memref<1x16xf32, #tpu.memory_space<vmem>>, %arg23: memref<16x16xf32, #tpu.memory_space<vmem>>, %arg24: memref<1x16xf32, #tpu.memory_space<vmem>>, %arg25: memref<9x60xf32, #tpu.memory_space<vmem>>) attributes {dimension_semantics = [], scalar_prefetch = 0 : i64, scratch_operands = 0 : i64, tpu.core_type = #tpu.core_type<tc>} {
    %c0 = arith.constant 0 : index
    %c0_0 = arith.constant 0 : index
    %0 = vector.load %arg1[%c0, %c0_0] : memref<12x9xbf16, #tpu.memory_space<vmem>>, vector<12x9xbf16>
    %c0_1 = arith.constant 0 : index
    %c0_2 = arith.constant 0 : index
    %1 = vector.load %arg2[%c0_1, %c0_2] : memref<12x9xbf16, #tpu.memory_space<vmem>>, vector<12x9xbf16>
    %c0_3 = arith.constant 0 : index
    %c0_4 = arith.constant 0 : index
    %2 = vector.load %arg3[%c0_3, %c0_4] : memref<12x8xf32, #tpu.memory_space<vmem>>, vector<12x8xf32>
    %c0_5 = arith.constant 0 : index
    %c0_6 = arith.constant 0 : index
    %3 = vector.load %arg0[%c0_5, %c0_6] : memref<9x12xf32, #tpu.memory_space<vmem>>, vector<9x12xf32>
    %c0_7 = arith.constant 0 : index
    %c0_8 = arith.constant 0 : index
    %4 = vector.load %arg25[%c0_7, %c0_8] : memref<9x60xf32, #tpu.memory_space<vmem>>, vector<9x12xf32>
    tpu.vector_store %arg25[%c0_7, %c0_8], %3 {strides = array<i32>} : memref<9x60xf32, #tpu.memory_space<vmem>>, vector<9x12xf32>,
    %c0_9 = arith.constant 0 : index
    %5 = memref.load %arg4[%c0_9] : memref<3xf32, #tpu.memory_space<smem>>
    %6 = arith.truncf %3 : vector<9x12xf32> to vector<9x12xbf16>
    %cst = arith.constant dense<0.000000e+00> : vector<12x12xf32>
    %7 = tpu.matmul %0, %6, %cst {dimension_numbers = #tpu.dot_dimension_numbers<[1], [0], [0], [1], [0, 0, 1, 1], [], []>} : vector<12x9xbf16>, vector<9x12xbf16>, vector<12x12xf32> -> vector<12x12xf32>
    %c0_10 = arith.constant 0 : index
    %c0_11 = arith.constant 0 : index
    %8 = vector.load %arg5[%c0_10, %c0_11] : memref<8x12xf32, #tpu.memory_space<vmem>>, vector<8x12xf32>
    %cst_12 = arith.constant dense<0.000000e+00> : vector<12x12xf32>
    %9 = tpu.matmul %2, %8, %cst_12 {dimension_numbers = #tpu.dot_dimension_numbers<[1], [0], [0], [1], [0, 0, 1, 1], [], []>} : vector<12x8xf32>, vector<8x12xf32>, vector<12x12xf32> -> vector<12x12xf32>
    %c0_13 = arith.constant 0 : index
    %c0_14 = arith.constant 0 : index
    %10 = vector.load %arg6[%c0_13, %c0_14] : memref<1x12xf32, #tpu.memory_space<vmem>>, vector<1x12xf32>
    %11 = vector.broadcast %10 : vector<1x12xf32> to vector<12x12xf32>
    %12 = arith.addf %9, %11 : vector<12x12xf32>
    %13 = arith.addf %7, %12 : vector<12x12xf32>
    %cst_15 = arith.constant 0.000000e+00 : f32
    %14 = vector.broadcast %cst_15 : f32 to vector<12x12xf32>
    %15 = arith.maximumf %13, %14 : vector<12x12xf32>
    %16 = arith.truncf %15 : vector<12x12xf32> to vector<12x12xbf16>
    %cst_16 = arith.constant dense<0.000000e+00> : vector<9x12xf32>
    %17 = tpu.matmul %1, %16, %cst_16 {dimension_numbers = #tpu.dot_dimension_numbers<[0], [0], [1], [1], [0, 1, 1, 1], [], []>} : vector<12x9xbf16>, vector<12x12xbf16>, vector<9x12xf32> -> vector<9x12xf32>
    %18 = arith.addf %3, %17 : vector<9x12xf32>
    %c0_17 = arith.constant 0 : index
    %c0_18 = arith.constant 0 : index
    %19 = vector.load %arg7[%c0_17, %c0_18] : memref<12x16xf32, #tpu.memory_space<vmem>>, vector<12x16xf32>
    %cst_19 = arith.constant dense<0.000000e+00> : vector<9x16xf32>
    %20 = tpu.matmul %18, %19, %cst_19 {dimension_numbers = #tpu.dot_dimension_numbers<[1], [0], [0], [1], [0, 0, 1, 1], [], []>} : vector<9x12xf32>, vector<12x16xf32>, vector<9x16xf32> -> vector<9x16xf32>
    %c0_20 = arith.constant 0 : index
    %c0_21 = arith.constant 0 : index
    %21 = vector.load %arg8[%c0_20, %c0_21] : memref<1x16xf32, #tpu.memory_space<vmem>>, vector<1x16xf32>
    %22 = vector.broadcast %21 : vector<1x16xf32> to vector<9x16xf32>
    %23 = arith.addf %20, %22 : vector<9x16xf32>
    %cst_22 = arith.constant 0.000000e+00 : f32
    %24 = vector.broadcast %cst_22 : f32 to vector<9x16xf32>
    %25 = arith.maximumf %23, %24 : vector<9x16xf32>
    %c0_23 = arith.constant 0 : index
    %c0_24 = arith.constant 0 : index
    %26 = vector.load %arg9[%c0_23, %c0_24] : memref<16x16xf32, #tpu.memory_space<vmem>>, vector<16x16xf32>
    %cst_25 = arith.constant dense<0.000000e+00> : vector<9x16xf32>
    %27 = tpu.matmul %25, %26, %cst_25 {dimension_numbers = #tpu.dot_dimension_numbers<[1], [0], [0], [1], [0, 0, 1, 1], [], []>} : vector<9x16xf32>, vector<16x16xf32>, vector<9x16xf32> -> vector<9x16xf32>
    %c0_26 = arith.constant 0 : index
    %c0_27 = arith.constant 0 : index
    %28 = vector.load %arg10[%c0_26, %c0_27] : memref<1x16xf32, #tpu.memory_space<vmem>>, vector<1x16xf32>
    %29 = vector.broadcast %28 : vector<1x16xf32> to vector<9x16xf32>
    %30 = arith.addf %27, %29 : vector<9x16xf32>
    %c0_28 = arith.constant 0 : index
    %c0_29 = arith.constant 0 : index
    %31 = vector.load %arg11[%c0_28, %c0_29] : memref<12x16xf32, #tpu.memory_space<vmem>>, vector<12x16xf32>
    %cst_30 = arith.constant dense<0.000000e+00> : vector<9x16xf32>
    %32 = tpu.matmul %3, %31, %cst_30 {dimension_numbers = #tpu.dot_dimension_numbers<[1], [0], [0], [1], [0, 0, 1, 1], [], []>} : vector<9x12xf32>, vector<12x16xf32>, vector<9x16xf32> -> vector<9x16xf32>
    %c0_31 = arith.constant 0 : index
    %c0_32 = arith.constant 0 : index
    %33 = vector.load %arg12[%c0_31, %c0_32] : memref<1x16xf32, #tpu.memory_space<vmem>>, vector<1x16xf32>
    %34 = vector.broadcast %33 : vector<1x16xf32> to vector<9x16xf32>
    %35 = arith.addf %32, %34 : vector<9x16xf32>
    %36 = vector.broadcast %5 : f32 to vector<9x16xf32>
    %37 = arith.mulf %36, %35 : vector<9x16xf32>
    %cst_33 = arith.constant 1.000000e+00 : f32
    %38 = arith.subf %cst_33, %5 : f32
    %39 = vector.broadcast %38 : f32 to vector<9x16xf32>
    %40 = arith.mulf %39, %30 : vector<9x16xf32>
    %41 = arith.addf %37, %40 : vector<9x16xf32>
    %c0_34 = arith.constant 0 : index
    %c12 = arith.constant 12 : index
    %42 = vector.load %arg25[%c0_34, %c12] : memref<9x60xf32, #tpu.memory_space<vmem>>, vector<9x16xf32>
    tpu.vector_store %arg25[%c0_34, %c12], %41 {strides = array<i32>} : memref<9x60xf32, #tpu.memory_space<vmem>>, vector<9x16xf32>,
    %c1 = arith.constant 1 : index
    %43 = memref.load %arg4[%c1] : memref<3xf32, #tpu.memory_space<smem>>
    %44 = arith.truncf %41 : vector<9x16xf32> to vector<9x16xbf16>
    %cst_35 = arith.constant dense<0.000000e+00> : vector<12x16xf32>
    %45 = tpu.matmul %0, %44, %cst_35 {dimension_numbers = #tpu.dot_dimension_numbers<[1], [0], [0], [1], [0, 0, 1, 1], [], []>} : vector<12x9xbf16>, vector<9x16xbf16>, vector<12x16xf32> -> vector<12x16xf32>
    %c0_36 = arith.constant 0 : index
    %c0_37 = arith.constant 0 : index
    %46 = vector.load %arg13[%c0_36, %c0_37] : memref<8x16xf32, #tpu.memory_space<vmem>>, vector<8x16xf32>
    %cst_38 = arith.constant dense<0.000000e+00> : vector<12x16xf32>
    %47 = tpu.matmul %2, %46, %cst_38 {dimension_numbers = #tpu.dot_dimension_numbers<[1], [0], [0], [1], [0, 0, 1, 1], [], []>} : vector<12x8xf32>, vector<8x16xf32>, vector<12x16xf32> -> vector<12x16xf32>
    %c0_39 = arith.constant 0 : index
    %c0_40 = arith.constant 0 : index
    %48 = vector.load %arg14[%c0_39, %c0_40] : memref<1x16xf32, #tpu.memory_space<vmem>>, vector<1x16xf32>
    %49 = vector.broadcast %48 : vector<1x16xf32> to vector<12x16xf32>
    %50 = arith.addf %47, %49 : vector<12x16xf32>
    %51 = arith.addf %45, %50 : vector<12x16xf32>
    %cst_41 = arith.constant 0.000000e+00 : f32
    %52 = vector.broadcast %cst_41 : f32 to vector<12x16xf32>
    %53 = arith.maximumf %51, %52 : vector<12x16xf32>
    %54 = arith.truncf %53 : vector<12x16xf32> to vector<12x16xbf16>
    %cst_42 = arith.constant dense<0.000000e+00> : vector<9x16xf32>
    %55 = tpu.matmul %1, %54, %cst_42 {dimension_numbers = #tpu.dot_dimension_numbers<[0], [0], [1], [1], [0, 1, 1, 1], [], []>} : vector<12x9xbf16>, vector<12x16xbf16>, vector<9x16xf32> -> vector<9x16xf32>
    %56 = arith.addf %41, %55 : vector<9x16xf32>
    %c0_43 = arith.constant 0 : index
    %c0_44 = arith.constant 0 : index
    %57 = vector.load %arg15[%c0_43, %c0_44] : memref<16x16xf32, #tpu.memory_space<vmem>>, vector<16x16xf32>
    %cst_45 = arith.constant dense<0.000000e+00> : vector<9x16xf32>
    %58 = tpu.matmul %56, %57, %cst_45 {dimension_numbers = #tpu.dot_dimension_numbers<[1], [0], [0], [1], [0, 0, 1, 1], [], []>} : vector<9x16xf32>, vector<16x16xf32>, vector<9x16xf32> -> vector<9x16xf32>
    %c0_46 = arith.constant 0 : index
    %c0_47 = arith.constant 0 : index
    %59 = vector.load %arg16[%c0_46, %c0_47] : memref<1x16xf32, #tpu.memory_space<vmem>>, vector<1x16xf32>
    %60 = vector.broadcast %59 : vector<1x16xf32> to vector<9x16xf32>
    %61 = arith.addf %58, %60 : vector<9x16xf32>
    %cst_48 = arith.constant 0.000000e+00 : f32
    %62 = vector.broadcast %cst_48 : f32 to vector<9x16xf32>
    %63 = arith.maximumf %61, %62 : vector<9x16xf32>
    %c0_49 = arith.constant 0 : index
    %c0_50 = arith.constant 0 : index
    %64 = vector.load %arg17[%c0_49, %c0_50] : memref<16x16xf32, #tpu.memory_space<vmem>>, vector<16x16xf32>
    %cst_51 = arith.constant dense<0.000000e+00> : vector<9x16xf32>
    %65 = tpu.matmul %63, %64, %cst_51 {dimension_numbers = #tpu.dot_dimension_numbers<[1], [0], [0], [1], [0, 0, 1, 1], [], []>} : vector<9x16xf32>, vector<16x16xf32>, vector<9x16xf32> -> vector<9x16xf32>
    %c0_52 = arith.constant 0 : index
    %c0_53 = arith.constant 0 : index
    %66 = vector.load %arg18[%c0_52, %c0_53] : memref<1x16xf32, #tpu.memory_space<vmem>>, vector<1x16xf32>
    %67 = vector.broadcast %66 : vector<1x16xf32> to vector<9x16xf32>
    %68 = arith.addf %65, %67 : vector<9x16xf32>
    %69 = vector.broadcast %43 : f32 to vector<9x16xf32>
    %70 = arith.mulf %69, %41 : vector<9x16xf32>
    %cst_54 = arith.constant 1.000000e+00 : f32
    %71 = arith.subf %cst_54, %43 : f32
    %72 = vector.broadcast %71 : f32 to vector<9x16xf32>
    %73 = arith.mulf %72, %68 : vector<9x16xf32>
    %74 = arith.addf %70, %73 : vector<9x16xf32>
    %c0_55 = arith.constant 0 : index
    %c28 = arith.constant 28 : index
    %75 = vector.load %arg25[%c0_55, %c28] : memref<9x60xf32, #tpu.memory_space<vmem>>, vector<9x16xf32>
    tpu.vector_store %arg25[%c0_55, %c28], %74 {strides = array<i32>} : memref<9x60xf32, #tpu.memory_space<vmem>>, vector<9x16xf32>,
    %c2 = arith.constant 2 : index
    %76 = memref.load %arg4[%c2] : memref<3xf32, #tpu.memory_space<smem>>
    %77 = arith.truncf %74 : vector<9x16xf32> to vector<9x16xbf16>
    %cst_56 = arith.constant dense<0.000000e+00> : vector<12x16xf32>
    %78 = tpu.matmul %0, %77, %cst_56 {dimension_numbers = #tpu.dot_dimension_numbers<[1], [0], [0], [1], [0, 0, 1, 1], [], []>} : vector<12x9xbf16>, vector<9x16xbf16>, vector<12x16xf32> -> vector<12x16xf32>
    %c0_57 = arith.constant 0 : index
    %c0_58 = arith.constant 0 : index
    %79 = vector.load %arg19[%c0_57, %c0_58] : memref<8x16xf32, #tpu.memory_space<vmem>>, vector<8x16xf32>
    %cst_59 = arith.constant dense<0.000000e+00> : vector<12x16xf32>
    %80 = tpu.matmul %2, %79, %cst_59 {dimension_numbers = #tpu.dot_dimension_numbers<[1], [0], [0], [1], [0, 0, 1, 1], [], []>} : vector<12x8xf32>, vector<8x16xf32>, vector<12x16xf32> -> vector<12x16xf32>
    %c0_60 = arith.constant 0 : index
    %c0_61 = arith.constant 0 : index
    %81 = vector.load %arg20[%c0_60, %c0_61] : memref<1x16xf32, #tpu.memory_space<vmem>>, vector<1x16xf32>
    %82 = vector.broadcast %81 : vector<1x16xf32> to vector<12x16xf32>
    %83 = arith.addf %80, %82 : vector<12x16xf32>
    %84 = arith.addf %78, %83 : vector<12x16xf32>
    %cst_62 = arith.constant 0.000000e+00 : f32
    %85 = vector.broadcast %cst_62 : f32 to vector<12x16xf32>
    %86 = arith.maximumf %84, %85 : vector<12x16xf32>
    %87 = arith.truncf %86 : vector<12x16xf32> to vector<12x16xbf16>
    %cst_63 = arith.constant dense<0.000000e+00> : vector<9x16xf32>
    %88 = tpu.matmul %1, %87, %cst_63 {dimension_numbers = #tpu.dot_dimension_numbers<[0], [0], [1], [1], [0, 1, 1, 1], [], []>} : vector<12x9xbf16>, vector<12x16xbf16>, vector<9x16xf32> -> vector<9x16xf32>
    %89 = arith.addf %74, %88 : vector<9x16xf32>
    %c0_64 = arith.constant 0 : index
    %c0_65 = arith.constant 0 : index
    %90 = vector.load %arg21[%c0_64, %c0_65] : memref<16x16xf32, #tpu.memory_space<vmem>>, vector<16x16xf32>
    %cst_66 = arith.constant dense<0.000000e+00> : vector<9x16xf32>
    %91 = tpu.matmul %89, %90, %cst_66 {dimension_numbers = #tpu.dot_dimension_numbers<[1], [0], [0], [1], [0, 0, 1, 1], [], []>} : vector<9x16xf32>, vector<16x16xf32>, vector<9x16xf32> -> vector<9x16xf32>
    %c0_67 = arith.constant 0 : index
    %c0_68 = arith.constant 0 : index
    %92 = vector.load %arg22[%c0_67, %c0_68] : memref<1x16xf32, #tpu.memory_space<vmem>>, vector<1x16xf32>
    %93 = vector.broadcast %92 : vector<1x16xf32> to vector<9x16xf32>
    %94 = arith.addf %91, %93 : vector<9x16xf32>
    %cst_69 = arith.constant 0.000000e+00 : f32
    %95 = vector.broadcast %cst_69 : f32 to vector<9x16xf32>
    %96 = arith.maximumf %94, %95 : vector<9x16xf32>
    %c0_70 = arith.constant 0 : index
    %c0_71 = arith.constant 0 : index
    %97 = vector.load %arg23[%c0_70, %c0_71] : memref<16x16xf32, #tpu.memory_space<vmem>>, vector<16x16xf32>
    %cst_72 = arith.constant dense<0.000000e+00> : vector<9x16xf32>
    %98 = tpu.matmul %96, %97, %cst_72 {dimension_numbers = #tpu.dot_dimension_numbers<[1], [0], [0], [1], [0, 0, 1, 1], [], []>} : vector<9x16xf32>, vector<16x16xf32>, vector<9x16xf32> -> vector<9x16xf32>
    %c0_73 = arith.constant 0 : index
    %c0_74 = arith.constant 0 : index
    %99 = vector.load %arg24[%c0_73, %c0_74] : memref<1x16xf32, #tpu.memory_space<vmem>>, vector<1x16xf32>
    %100 = vector.broadcast %99 : vector<1x16xf32> to vector<9x16xf32>
    %101 = arith.addf %98, %100 : vector<9x16xf32>
    %102 = vector.broadcast %76 : f32 to vector<9x16xf32>
    %103 = arith.mulf %102, %74 : vector<9x16xf32>
    %cst_75 = arith.constant 1.000000e+00 : f32
    %104 = arith.subf %cst_75, %76 : f32
    %105 = vector.broadcast %104 : f32 to vector<9x16xf32>
    %106 = arith.mulf %105, %101 : vector<9x16xf32>
    %107 = arith.addf %103, %106 : vector<9x16xf32>
    %c0_76 = arith.constant 0 : index
    %c44 = arith.constant 44 : index
    %108 = vector.load %arg25[%c0_76, %c44] : memref<9x60xf32, #tpu.memory_space<vmem>>, vector<9x16xf32>
    tpu.vector_store %arg25[%c0_76, %c44], %107 {strides = array<i32>} : memref<9x60xf32, #tpu.memory_space<vmem>>, vector<9x16xf32>,
    return
  }
}

</mosaic_0001>

<llo_original>
// kernel: tpu_custom_call.1
$region0: #{tpu_custom_call.1}
  #allocation0 [shape = 'u32[]', space=smem, size = 0x4, offset = 0x4, fixed_abs, tag = 'smem constant byte address 0x4 - core index']
  #allocation1 [shape = 'u32[144,128]{1,0:T(1,128)}', space=vmem, size = 0x12000, scoped, tag = 'internal scratch']
  %s0 = inlined_call_operand.vmem [shape: f32[9,12], index: 0, kind: input, shape index: {}]
  %s1 = inlined_call_operand.hbm [shape: bf16[12,9], index: 1, kind: input, shape index: {}]
  %s2 = inlined_call_operand.hbm [shape: bf16[12,9], index: 2, kind: input, shape index: {}]
  %s3 = inlined_call_operand.vmem [shape: f32[12,8], index: 3, kind: input, shape index: {}]
  %s4 = inlined_call_operand.hbm [shape: f32[3], index: 4, kind: input, shape index: {}]
  %s5 = inlined_call_operand.hbm [shape: f32[8,12], index: 5, kind: input, shape index: {}]
  %s6 = inlined_call_operand.hbm [shape: f32[1,12], index: 6, kind: input, shape index: {}]
  %s7 = inlined_call_operand.vmem [shape: f32[12,16], index: 7, kind: input, shape index: {}]
  %s8 = inlined_call_operand.hbm [shape: f32[1,16], index: 8, kind: input, shape index: {}]
  %s9 = inlined_call_operand.hbm [shape: f32[16,16], index: 9, kind: input, shape index: {}]
  %s10 = inlined_call_operand.hbm [shape: f32[1,16], index: 10, kind: input, shape index: {}]
  %s11 = inlined_call_operand.hbm [shape: f32[12,16], index: 11, kind: input, shape index: {}]
  %s12 = inlined_call_operand.hbm [shape: f32[1,16], index: 12, kind: input, shape index: {}]
  %s13 = inlined_call_operand.hbm [shape: f32[8,16], index: 13, kind: input, shape index: {}]
  %s14 = inlined_call_operand.hbm [shape: f32[1,16], index: 14, kind: input, shape index: {}]
  %s15 = inlined_call_operand.vmem [shape: f32[16,16], index: 15, kind: input, shape index: {}]
  %s16 = inlined_call_operand.hbm [shape: f32[1,16], index: 16, kind: input, shape index: {}]
  %s17 = inlined_call_operand.hbm [shape: f32[16,16], index: 17, kind: input, shape index: {}]
  %s18 = inlined_call_operand.hbm [shape: f32[1,16], index: 18, kind: input, shape index: {}]
  %s19 = inlined_call_operand.hbm [shape: f32[8,16], index: 19, kind: input, shape index: {}]
  %s20 = inlined_call_operand.hbm [shape: f32[1,16], index: 20, kind: input, shape index: {}]
  %s21 = inlined_call_operand.hbm [shape: f32[16,16], index: 21, kind: input, shape index: {}]
  %s22 = inlined_call_operand.hbm [shape: f32[1,16], index: 22, kind: input, shape index: {}]
  %s23 = inlined_call_operand.vmem [shape: f32[16,16], index: 23, kind: input, shape index: {}]
  %s24 = inlined_call_operand.vmem [shape: f32[1,16], index: 24, kind: input, shape index: {}]
  %s25 = inlined_call_operand.hbm [shape: f32[9,60], index: 25, kind: output, shape index: {}]
  %s26 = sld [smem:[#allocation0]]
  $region186: #{tpu_custom_call.1} parent=0
    _
  %s28 = ssub.s32 1, %s26
  %s29 = scalar_select 0, %s28, %s26
  $region1: #{tpu_custom_call.1} parent=0
    #allocation2 [shape = 'u8[4096]{0}', space=vmem, size = 0x1000, scoped, tag = 'input window, operand 1, single buffered']
    #allocation3 [shape = 's32[1]{0}', space=sflag, size = 0x4, scoped, tag = 'scoped memory for tpu_custom_call.1']
    #allocation4 [shape = 's32[1]{0}', space=sflag, size = 0x4, scoped, tag = 'scoped memory for tpu_custom_call.1']
    #allocation5 [shape = 's32[1]{0}', space=sflag, size = 0x4, scoped, tag = 'scoped memory for tpu_custom_call.1']
    #allocation6 [shape = 'u8[4096]{0}', space=vmem, size = 0x1000, scoped, tag = 'input window, operand 2, single buffered']
    #allocation7 [shape = 's32[1]{0}', space=sflag, size = 0x4, scoped, tag = 'scoped memory for tpu_custom_call.1']
    #allocation8 [shape = 'u8[512]{0}', space=smem, size = 0x200, scoped, tag = 'input window, operand 4, single buffered']
    #allocation9 [shape = 'u8[4096]{0}', space=vmem, size = 0x1000, scoped, tag = 'input window, operand 5, single buffered']
    #allocation10 [shape = 'u8[512]{0}', space=vmem, size = 0x400, scoped, tag = 'input window, operand 6, single buffered']
    #allocation11 [shape = 's32[1]{0}', space=sflag, size = 0x4, scoped, tag = 'scoped memory for tpu_custom_call.1']
    #allocation12 [shape = 'u8[512]{0}', space=vmem, size = 0x400, scoped, tag = 'input window, operand 8, single buffered']
    #allocation13 [shape = 'u8[8192]{0}', space=vmem, size = 0x2000, scoped, tag = 'input window, operand 9, single buffered']
    #allocation14 [shape = 's32[1]{0}', space=sflag, size = 0x4, scoped, tag = 'scoped memory for tpu_custom_call.1']
    #allocation15 [shape = 'u8[512]{0}', space=vmem, size = 0x400, scoped, tag = 'input window, operand 10, single buffered']
    #allocation16 [shape = 'u8[8192]{0}', space=vmem, size = 0x2000, scoped, tag = 'input window, operand 11, single buffered']
    #allocation17 [shape = 's32[1]{0}', space=sflag, size = 0x4, scoped, tag = 'scoped memory for tpu_custom_call.1']
    #allocation18 [shape = 'u8[512]{0}', space=vmem, size = 0x400, scoped, tag = 'input window, operand 12, single buffered']
    #allocation19 [shape = 'u8[4096]{0}', space=vmem, size = 0x1000, scoped, tag = 'input window, operand 13, single buffered']
    #allocation20 [shape = 's32[1]{0}', space=sflag, size = 0x4, scoped, tag = 'scoped memory for tpu_custom_call.1']
    #allocation21 [shape = 'u8[512]{0}', space=vmem, size = 0x400, scoped, tag = 'input window, operand 14, single buffered']
    #allocation22 [shape = 'u8[512]{0}', space=vmem, size = 0x400, scoped, tag = 'input window, operand 16, single buffered']
    #allocation23 [shape = 's32[1]{0}', space=sflag, size = 0x4, scoped, tag = 'scoped memory for tpu_custom_call.1']
    #allocation24 [shape = 'u8[8192]{0}', space=vmem, size = 0x2000, scoped, tag = 'input window, operand 17, single buffered']
    #allocation25 [shape = 'u8[512]{0}', space=vmem, size = 0x400, scoped, tag = 'input window, operand 18, single buffered']
    #allocation26 [shape = 's32[1]{0}', space=sflag, size = 0x4, scoped, tag = 'scoped memory for tpu_custom_call.1']
    #allocation27 [shape = 'u8[4096]{0}', space=vmem, size = 0x1000, scoped, tag = 'input window, operand 19, single buffered']
    #allocation28 [shape = 'u8[512]{0}', space=vmem, size = 0x400, scoped, tag = 'input window, operand 20, single buffered']
    #allocation29 [shape = 's32[1]{0}', space=sflag, size = 0x4, scoped, tag = 'scoped memory for tpu_custom_call.1']
    #allocation30 [shape = 'u8[8192]{0}', space=vmem, size = 0x2000, scoped, tag = 'input window, operand 21, single buffered']
    #allocation31 [shape = 'u8[512]{0}', space=vmem, size = 0x400, scoped, tag = 'input window, operand 22, single buffered']
    #allocation32 [shape = 's32[1]{0}', space=sflag, size = 0x4, scoped, tag = 'scoped memory for tpu_custom_call.1']
    #allocation33 [shape = 'u8[8192]{0}', space=vmem, size = 0x2000, scoped, tag = 'output window, operand 0, single buffered']
    %30 = vsyncpa [#allocation3], 0
    %31 = vsyncpa [#allocation7], 0
    %32 = vsyncpa [#allocation5], 0
    %33 = vsyncpa [#allocation11], 0
    %34 = vsyncpa [#allocation14], 0
    %35 = vsyncpa [#allocation17], 0
    %36 = vsyncpa [#allocation20], 0
    %37 = vsyncpa [#allocation23], 0
    %38 = vsyncpa [#allocation26], 0
    %39 = vsyncpa [#allocation29], 0
    %40 = vsyncpa [#allocation32], 0
    %41 = vsyncpa [#allocation4], 0
    // Predicated region
    $region2: #{tpu_custom_call.1} parent=1 // pred_check
      _
    $region3: #{tpu_custom_call.1} parent=1 // pred_check_branch
      %43 = sbr.rel (0) target = $region5
    $region4: #{tpu_custom_call.1} parent=1 // pred_region
      _
    $region5: #{tpu_custom_call.1} parent=1 // pred_fallthru
      _
    // Predicated region
    $region6: #{tpu_custom_call.1} parent=1 // pred_check
      _
    $region7: #{tpu_custom_call.1} parent=1 // pred_check_branch
      %45 = sbr.rel (0) target = $region9
    $region8: #{tpu_custom_call.1} parent=1 // pred_region
      %s47 = ssub.s32 128, 128
      %48 = vsyncadd [#allocation3], %s47
      %s49 = sshll.u32 [#allocation2], 4
      %s50 = int_to_ptr.vmem [resolvable:$true] %s49
      %55 = dma.hbm_to_vmem [thread:$0]  %s1, 128, %s50, [#allocation3], 64, 64, 4
    $region9: #{tpu_custom_call.1} parent=1 // pred_fallthru
      _
    // Predicated region
    $region10: #{tpu_custom_call.1} parent=1 // pred_check
      _
    $region11: #{tpu_custom_call.1} parent=1 // pred_check_branch
      %57 = sbr.rel (0) target = $region13
    $region12: #{tpu_custom_call.1} parent=1 // pred_region
      %s59 = ssub.s32 128, 128
      %60 = vsyncadd [#allocation7], %s59
      %s61 = sshll.u32 [#allocation6], 4
      %s62 = int_to_ptr.vmem [resolvable:$true] %s61
      %67 = dma.hbm_to_vmem [thread:$0]  %s2, 128, %s62, [#allocation7], 64, 64, 4
    $region13: #{tpu_custom_call.1} parent=1 // pred_fallthru
      _
    // Predicated region
    $region14: #{tpu_custom_call.1} parent=1 // pred_check
      _
    $region15: #{tpu_custom_call.1} parent=1 // pred_check_branch
      %69 = sbr.rel (0) target = $region17
    $region16: #{tpu_custom_call.1} parent=1 // pred_region
      _
    $region17: #{tpu_custom_call.1} parent=1 // pred_fallthru
      _
    // Predicated region
    $region18: #{tpu_custom_call.1} parent=1 // pred_check
      _
    $region19: #{tpu_custom_call.1} parent=1 // pred_check_branch
      %71 = sbr.rel (0) target = $region21
    $region20: #{tpu_custom_call.1} parent=1 // pred_region
      %s73 = ssub.s32 16, 16
      %74 = vsyncadd [#allocation5], %s73
      %77 = dma.hbm_to_smem %s4, 16, [#allocation8], [#allocation5]
    $region21: #{tpu_custom_call.1} parent=1 // pred_fallthru
      _
    // Predicated region
    $region22: #{tpu_custom_call.1} parent=1 // pred_check
      _
    $region23: #{tpu_custom_call.1} parent=1 // pred_check_branch
      %79 = sbr.rel (0) target = $region25
    $region24: #{tpu_custom_call.1} parent=1 // pred_region
      %s81 = ssub.s32 128, 128
      %82 = vsyncadd [#allocation7], %s81
      %s84 = sshll.u32 [#allocation9], 4
      %s85 = int_to_ptr.vmem [resolvable:$true] %s84
      %87 = dma.hbm_to_vmem [thread:$0]  %s5, 128, %s85, [#allocation7]
    $region25: #{tpu_custom_call.1} parent=1 // pred_fallthru
      _
    // Predicated region
    $region26: #{tpu_custom_call.1} parent=1 // pred_check
      _
    $region27: #{tpu_custom_call.1} parent=1 // pred_check_branch
      %89 = sbr.rel (0) target = $region29
    $region28: #{tpu_custom_call.1} parent=1 // pred_region
      %s91 = ssub.s32 16, 16
      %92 = vsyncadd [#allocation11], %s91
      %s94 = sshll.u32 [#allocation10], 4
      %s95 = int_to_ptr.vmem [resolvable:$true] %s94
      %97 = dma.hbm_to_vmem [thread:$0]  %s6, 16, %s95, [#allocation11]
    $region29: #{tpu_custom_call.1} parent=1 // pred_fallthru
      _
    // Predicated region
    $region30: #{tpu_custom_call.1} parent=1 // pred_check
      _
    $region31: #{tpu_custom_call.1} parent=1 // pred_check_branch
      %99 = sbr.rel (0) target = $region33
    $region32: #{tpu_custom_call.1} parent=1 // pred_region
      _
    $region33: #{tpu_custom_call.1} parent=1 // pred_fallthru
      _
    // Predicated region
    $region34: #{tpu_custom_call.1} parent=1 // pred_check
      _
    $region35: #{tpu_custom_call.1} parent=1 // pred_check_branch
      %101 = sbr.rel (0) target = $region37
    $region36: #{tpu_custom_call.1} parent=1 // pred_region
      %s103 = ssub.s32 16, 16
      %104 = vsyncadd [#allocation11], %s103
      %s106 = sshll.u32 [#allocation12], 4
      %s107 = int_to_ptr.vmem [resolvable:$true] %s106
      %109 = dma.hbm_to_vmem [thread:$0]  %s8, 16, %s107, [#allocation11]
    $region37: #{tpu_custom_call.1} parent=1 // pred_fallthru
      _
    // Predicated region
    $region38: #{tpu_custom_call.1} parent=1 // pred_check
      _
    $region39: #{tpu_custom_call.1} parent=1 // pred_check_branch
      %111 = sbr.rel (0) target = $region41
    $region40: #{tpu_custom_call.1} parent=1 // pred_region
      %s113 = ssub.s32 256, 256
      %114 = vsyncadd [#allocation14], %s113
      %s115 = sshll.u32 [#allocation13], 4
      %s116 = int_to_ptr.vmem [resolvable:$true] %s115
      %121 = dma.hbm_to_vmem [thread:$0]  %s9, 256, %s116, [#allocation14], 128, 128, 8
    $region41: #{tpu_custom_call.1} parent=1 // pred_fallthru
      _
    // Predicated region
    $region42: #{tpu_custom_call.1} parent=1 // pred_check
      _
    $region43: #{tpu_custom_call.1} parent=1 // pred_check_branch
      %123 = sbr.rel (0) target = $region45
    $region44: #{tpu_custom_call.1} parent=1 // pred_region
      %s125 = ssub.s32 16, 16
      %126 = vsyncadd [#allocation14], %s125
      %s128 = sshll.u32 [#allocation15], 4
      %s129 = int_to_ptr.vmem [resolvable:$true] %s128
      %131 = dma.hbm_to_vmem [thread:$0]  %s10, 16, %s129, [#allocation14]
    $region45: #{tpu_custom_call.1} parent=1 // pred_fallthru
      _
    // Predicated region
    $region46: #{tpu_custom_call.1} parent=1 // pred_check
      _
    $region47: #{tpu_custom_call.1} parent=1 // pred_check_branch
      %133 = sbr.rel (0) target = $region49
    $region48: #{tpu_custom_call.1} parent=1 // pred_region
      %s135 = ssub.s32 256, 256
      %136 = vsyncadd [#allocation17], %s135
      %s137 = sshll.u32 [#allocation16], 4
      %s138 = int_to_ptr.vmem [resolvable:$true] %s137
      %143 = dma.hbm_to_vmem [thread:$0]  %s11, 256, %s138, [#allocation17], 128, 128, 8
    $region49: #{tpu_custom_call.1} parent=1 // pred_fallthru
      _
    // Predicated region
    $region50: #{tpu_custom_call.1} parent=1 // pred_check
      _
    $region51: #{tpu_custom_call.1} parent=1 // pred_check_branch
      %145 = sbr.rel (0) target = $region53
    $region52: #{tpu_custom_call.1} parent=1 // pred_region
      %s147 = ssub.s32 16, 16
      %148 = vsyncadd [#allocation17], %s147
      %s150 = sshll.u32 [#allocation18], 4
      %s151 = int_to_ptr.vmem [resolvable:$true] %s150
      %153 = dma.hbm_to_vmem [thread:$0]  %s12, 16, %s151, [#allocation17]
    $region53: #{tpu_custom_call.1} parent=1 // pred_fallthru
      _
    // Predicated region
    $region54: #{tpu_custom_call.1} parent=1 // pred_check
      _
    $region55: #{tpu_custom_call.1} parent=1 // pred_check_branch
      %155 = sbr.rel (0) target = $region57
    $region56: #{tpu_custom_call.1} parent=1 // pred_region
      %s157 = ssub.s32 128, 128
      %158 = vsyncadd [#allocation20], %s157
      %s160 = sshll.u32 [#allocation19], 4
      %s161 = int_to_ptr.vmem [resolvable:$true] %s160
      %163 = dma.hbm_to_vmem [thread:$0]  %s13, 128, %s161, [#allocation20]
    $region57: #{tpu_custom_call.1} parent=1 // pred_fallthru
      _
    // Predicated region
    $region58: #{tpu_custom_call.1} parent=1 // pred_check
      _
    $region59: #{tpu_custom_call.1} parent=1 // pred_check_branch
      %165 = sbr.rel (0) target = $region61
    $region60: #{tpu_custom_call.1} parent=1 // pred_region
      %s167 = ssub.s32 16, 16
      %168 = vsyncadd [#allocation20], %s167
      %s170 = sshll.u32 [#allocation21], 4
      %s171 = int_to_ptr.vmem [resolvable:$true] %s170
      %173 = dma.hbm_to_vmem [thread:$0]  %s14, 16, %s171, [#allocation20]
    $region61: #{tpu_custom_call.1} parent=1 // pred_fallthru
      _
    // Predicated region
    $region62: #{tpu_custom_call.1} parent=1 // pred_check
      _
    $region63: #{tpu_custom_call.1} parent=1 // pred_check_branch
      %175 = sbr.rel (0) target = $region65
    $region64: #{tpu_custom_call.1} parent=1 // pred_region
      _
    $region65: #{tpu_custom_call.1} parent=1 // pred_fallthru
      _
    // Predicated region
    $region66: #{tpu_custom_call.1} parent=1 // pred_check
      _
    $region67: #{tpu_custom_call.1} parent=1 // pred_check_branch
      %177 = sbr.rel (0) target = $region69
    $region68: #{tpu_custom_call.1} parent=1 // pred_region
      %s179 = ssub.s32 16, 16
      %180 = vsyncadd [#allocation23], %s179
      %s182 = sshll.u32 [#allocation22], 4
      %s183 = int_to_ptr.vmem [resolvable:$true] %s182
      %185 = dma.hbm_to_vmem [thread:$0]  %s16, 16, %s183, [#allocation23]
    $region69: #{tpu_custom_call.1} parent=1 // pred_fallthru
      _
    // Predicated region
    $region70: #{tpu_custom_call.1} parent=1 // pred_check
      _
    $region71: #{tpu_custom_call.1} parent=1 // pred_check_branch
      %187 = sbr.rel (0) target = $region73
    $region72: #{tpu_custom_call.1} parent=1 // pred_region
      %s189 = ssub.s32 256, 256
      %190 = vsyncadd [#allocation23], %s189
      %s191 = sshll.u32 [#allocation24], 4
      %s192 = int_to_ptr.vmem [resolvable:$true] %s191
      %197 = dma.hbm_to_vmem [thread:$0]  %s17, 256, %s192, [#allocation23], 128, 128, 8
    $region73: #{tpu_custom_call.1} parent=1 // pred_fallthru
      _
    // Predicated region
    $region74: #{tpu_custom_call.1} parent=1 // pred_check
      _
    $region75: #{tpu_custom_call.1} parent=1 // pred_check_branch
      %199 = sbr.rel (0) target = $region77
    $region76: #{tpu_custom_call.1} parent=1 // pred_region
      %s201 = ssub.s32 16, 16
      %202 = vsyncadd [#allocation26], %s201
      %s204 = sshll.u32 [#allocation25], 4
      %s205 = int_to_ptr.vmem [resolvable:$true] %s204
      %207 = dma.hbm_to_vmem [thread:$0]  %s18, 16, %s205, [#allocation26]
    $region77: #{tpu_custom_call.1} parent=1 // pred_fallthru
      _
    // Predicated region
    $region78: #{tpu_custom_call.1} parent=1 // pred_check
      _
    $region79: #{tpu_custom_call.1} parent=1 // pred_check_branch
      %209 = sbr.rel (0) target = $region81
    $region80: #{tpu_custom_call.1} parent=1 // pred_region
      %s211 = ssub.s32 128, 128
      %212 = vsyncadd [#allocation26], %s211
      %s214 = sshll.u32 [#allocation27], 4
      %s215 = int_to_ptr.vmem [resolvable:$true] %s214
      %217 = dma.hbm_to_vmem [thread:$0]  %s19, 128, %s215, [#allocation26]
    $region81: #{tpu_custom_call.1} parent=1 // pred_fallthru
      _
    // Predicated region
    $region82: #{tpu_custom_call.1} parent=1 // pred_check
      _
    $region83: #{tpu_custom_call.1} parent=1 // pred_check_branch
      %219 = sbr.rel (0) target = $region85
    $region84: #{tpu_custom_call.1} parent=1 // pred_region
      %s221 = ssub.s32 16, 16
      %222 = vsyncadd [#allocation29], %s221
      %s224 = sshll.u32 [#allocation28], 4
      %s225 = int_to_ptr.vmem [resolvable:$true] %s224
      %227 = dma.hbm_to_vmem [thread:$0]  %s20, 16, %s225, [#allocation29]
    $region85: #{tpu_custom_call.1} parent=1 // pred_fallthru
      _
    // Predicated region
    $region86: #{tpu_custom_call.1} parent=1 // pred_check
      _
    $region87: #{tpu_custom_call.1} parent=1 // pred_check_branch
      %229 = sbr.rel (0) target = $region89
    $region88: #{tpu_custom_call.1} parent=1 // pred_region
      %s231 = ssub.s32 256, 256
      %232 = vsyncadd [#allocation29], %s231
      %s233 = sshll.u32 [#allocation30], 4
      %s234 = int_to_ptr.vmem [resolvable:$true] %s233
      %239 = dma.hbm_to_vmem [thread:$0]  %s21, 256, %s234, [#allocation29], 128, 128, 8
    $region89: #{tpu_custom_call.1} parent=1 // pred_fallthru
      _
    // Predicated region
    $region90: #{tpu_custom_call.1} parent=1 // pred_check
      _
    $region91: #{tpu_custom_call.1} parent=1 // pred_check_branch
      %241 = sbr.rel (0) target = $region93
    $region92: #{tpu_custom_call.1} parent=1 // pred_region
      %s243 = ssub.s32 16, 16
      %244 = vsyncadd [#allocation32], %s243
      %s246 = sshll.u32 [#allocation31], 4
      %s247 = int_to_ptr.vmem [resolvable:$true] %s246
      %249 = dma.hbm_to_vmem [thread:$0]  %s22, 16, %s247, [#allocation32]
    $region93: #{tpu_custom_call.1} parent=1 // pred_fallthru
      _
    // Predicated region
    $region94: #{tpu_custom_call.1} parent=1 // pred_check
      _
    $region95: #{tpu_custom_call.1} parent=1 // pred_check_branch
      %251 = sbr.rel (0) target = $region97
    $region96: #{tpu_custom_call.1} parent=1 // pred_region
      _
    $region97: #{tpu_custom_call.1} parent=1 // pred_fallthru
      _
    // Predicated region
    $region98: #{tpu_custom_call.1} parent=1 // pred_check
      _
    $region99: #{tpu_custom_call.1} parent=1 // pred_check_branch
      %253 = sbr.rel (0) target = $region101
    $region100: #{tpu_custom_call.1} parent=1 // pred_region
      _
    $region101: #{tpu_custom_call.1} parent=1 // pred_fallthru
      _
    // Predicated region
    $region102: #{tpu_custom_call.1} parent=1 // pred_check
      _
    $region103: #{tpu_custom_call.1} parent=1 // pred_check_branch
      %255 = sbr.rel (0) target = $region105
    $region104: #{tpu_custom_call.1} parent=1 // pred_region
      %256 = dma.done [#allocation3], 128
    $region105: #{tpu_custom_call.1} parent=1 // pred_fallthru
      _
    // Predicated region
    $region106: #{tpu_custom_call.1} parent=1 // pred_check
      _
    $region107: #{tpu_custom_call.1} parent=1 // pred_check_branch
      %258 = sbr.rel (0) target = $region109
    $region108: #{tpu_custom_call.1} parent=1 // pred_region
      %259 = dma.done [#allocation7], 128
    $region109: #{tpu_custom_call.1} parent=1 // pred_fallthru
      _
    // Predicated region
    $region110: #{tpu_custom_call.1} parent=1 // pred_check
      _
    $region111: #{tpu_custom_call.1} parent=1 // pred_check_branch
      %261 = sbr.rel (0) target = $region113
    $region112: #{tpu_custom_call.1} parent=1 // pred_region
      %262 = dma.done [#allocation5], 16
    $region113: #{tpu_custom_call.1} parent=1 // pred_fallthru
      _
    // Predicated region
    $region114: #{tpu_custom_call.1} parent=1 // pred_check
      _
    $region115: #{tpu_custom_call.1} parent=1 // pred_check_branch
      %264 = sbr.rel (0) target = $region117
    $region116: #{tpu_custom_call.1} parent=1 // pred_region
      %265 = dma.done [#allocation7], 128
    $region117: #{tpu_custom_call.1} parent=1 // pred_fallthru
      _
    // Predicated region
    $region118: #{tpu_custom_call.1} parent=1 // pred_check
      _
    $region119: #{tpu_custom_call.1} parent=1 // pred_check_branch
      %267 = sbr.rel (0) target = $region121
    $region120: #{tpu_custom_call.1} parent=1 // pred_region
      %268 = dma.done [#allocation11], 16
    $region121: #{tpu_custom_call.1} parent=1 // pred_fallthru
      _
    // Predicated region
    $region122: #{tpu_custom_call.1} parent=1 // pred_check
      _
    $region123: #{tpu_custom_call.1} parent=1 // pred_check_branch
      %270 = sbr.rel (0) target = $region125
    $region124: #{tpu_custom_call.1} parent=1 // pred_region
      %271 = dma.done [#allocation11], 16
    $region125: #{tpu_custom_call.1} parent=1 // pred_fallthru
      _
    // Predicated region
    $region126: #{tpu_custom_call.1} parent=1 // pred_check
      _
    $region127: #{tpu_custom_call.1} parent=1 // pred_check_branch
      %273 = sbr.rel (0) target = $region129
    $region128: #{tpu_custom_call.1} parent=1 // pred_region
      %274 = dma.done [#allocation14], 256
    $region129: #{tpu_custom_call.1} parent=1 // pred_fallthru
      _
    // Predicated region
    $region130: #{tpu_custom_call.1} parent=1 // pred_check
      _
    $region131: #{tpu_custom_call.1} parent=1 // pred_check_branch
      %276 = sbr.rel (0) target = $region133
    $region132: #{tpu_custom_call.1} parent=1 // pred_region
      %277 = dma.done [#allocation14], 16
    $region133: #{tpu_custom_call.1} parent=1 // pred_fallthru
      _
    // Predicated region
    $region134: #{tpu_custom_call.1} parent=1 // pred_check
      _
    $region135: #{tpu_custom_call.1} parent=1 // pred_check_branch
      %279 = sbr.rel (0) target = $region137
    $region136: #{tpu_custom_call.1} parent=1 // pred_region
      %280 = dma.done [#allocation17], 256
    $region137: #{tpu_custom_call.1} parent=1 // pred_fallthru
      _
    // Predicated region
    $region138: #{tpu_custom_call.1} parent=1 // pred_check
      _
    $region139: #{tpu_custom_call.1} parent=1 // pred_check_branch
      %282 = sbr.rel (0) target = $region141
    $region140: #{tpu_custom_call.1} parent=1 // pred_region
      %283 = dma.done [#allocation17], 16
    $region141: #{tpu_custom_call.1} parent=1 // pred_fallthru
      _
    // Predicated region
    $region142: #{tpu_custom_call.1} parent=1 // pred_check
      _
    $region143: #{tpu_custom_call.1} parent=1 // pred_check_branch
      %285 = sbr.rel (0) target = $region145
    $region144: #{tpu_custom_call.1} parent=1 // pred_region
      %286 = dma.done [#allocation20], 128
    $region145: #{tpu_custom_call.1} parent=1 // pred_fallthru
      _
    // Predicated region
    $region146: #{tpu_custom_call.1} parent=1 // pred_check
      _
    $region147: #{tpu_custom_call.1} parent=1 // pred_check_branch
      %288 = sbr.rel (0) target = $region149
    $region148: #{tpu_custom_call.1} parent=1 // pred_region
      %289 = dma.done [#allocation20], 16
    $region149: #{tpu_custom_call.1} parent=1 // pred_fallthru
      _
    // Predicated region
    $region150: #{tpu_custom_call.1} parent=1 // pred_check
      _
    $region151: #{tpu_custom_call.1} parent=1 // pred_check_branch
      %291 = sbr.rel (0) target = $region153
    $region152: #{tpu_custom_call.1} parent=1 // pred_region
      %292 = dma.done [#allocation23], 16
    $region153: #{tpu_custom_call.1} parent=1 // pred_fallthru
      _
    // Predicated region
    $region154: #{tpu_custom_call.1} parent=1 // pred_check
      _
    $region155: #{tpu_custom_call.1} parent=1 // pred_check_branch
      %294 = sbr.rel (0) target = $region157
    $region156: #{tpu_custom_call.1} parent=1 // pred_region
      %295 = dma.done [#allocation23], 256
    $region157: #{tpu_custom_call.1} parent=1 // pred_fallthru
      _
    // Predicated region
    $region158: #{tpu_custom_call.1} parent=1 // pred_check
      _
    $region159: #{tpu_custom_call.1} parent=1 // pred_check_branch
      %297 = sbr.rel (0) target = $region161
    $region160: #{tpu_custom_call.1} parent=1 // pred_region
      %298 = dma.done [#allocation26], 16
    $region161: #{tpu_custom_call.1} parent=1 // pred_fallthru
      _
    // Predicated region
    $region162: #{tpu_custom_call.1} parent=1 // pred_check
      _
    $region163: #{tpu_custom_call.1} parent=1 // pred_check_branch
      %300 = sbr.rel (0) target = $region165
    $region164: #{tpu_custom_call.1} parent=1 // pred_region
      %301 = dma.done [#allocation26], 128
    $region165: #{tpu_custom_call.1} parent=1 // pred_fallthru
      _
    // Predicated region
    $region166: #{tpu_custom_call.1} parent=1 // pred_check
      _
    $region167: #{tpu_custom_call.1} parent=1 // pred_check_branch
      %303 = sbr.rel (0) target = $region169
    $region168: #{tpu_custom_call.1} parent=1 // pred_region
      %304 = dma.done [#allocation29], 16
    $region169: #{tpu_custom_call.1} parent=1 // pred_fallthru
      _
    // Predicated region
    $region170: #{tpu_custom_call.1} parent=1 // pred_check
      _
    $region171: #{tpu_custom_call.1} parent=1 // pred_check_branch
      %306 = sbr.rel (0) target = $region173
    $region172: #{tpu_custom_call.1} parent=1 // pred_region
      %307 = dma.done [#allocation29], 256
    $region173: #{tpu_custom_call.1} parent=1 // pred_fallthru
      _
    // Predicated region
    $region174: #{tpu_custom_call.1} parent=1 // pred_check
      _
    $region175: #{tpu_custom_call.1} parent=1 // pred_check_branch
      %309 = sbr.rel (0) target = $region177
    $region176: #{tpu_custom_call.1} parent=1 // pred_region
      %310 = dma.done [#allocation32], 16
    $region177: #{tpu_custom_call.1} parent=1 // pred_fallthru
      _
    %311 = sfence
    %v313 = vld [vmem:[#allocation2] sm:$0xf]
    %v314 = vld [vmem:[#allocation2 + $0x4] sm:$0x3]
    %v315 = vld [vmem:[#allocation6] sm:$0xf]
    %v316 = vld [vmem:[#allocation6 + $0x4] sm:$0x3]
    %v317 = vld [vmem:[%s3] sm:$0xff]
    %v318 = vld [vmem:[%s3 + $0x8] sm:$0xf]
    %v319 = vld [vmem:[%s0] sm:$0xff]
    %v320 = vld [vmem:[%s0 + $0x8] sm:$0x1]
    %vm321 = vcmask 97280
    %322 = vst.msk [vmem:[#allocation33] sm:$0xff] %vm321, %v319
    %vm323 = vcmask 90112
    %324 = vst.msk [vmem:[#allocation33 + $0x8] sm:$0x1] %vm323, %v320
    %s325 = sld [smem:[#allocation8]]
    %v326 = vpack.c.bf16 %v320, %v319
    %v327 = vld [vmem:[#allocation9] sm:$0xff]
    %v328 = vld [vmem:[#allocation10] sm:$0x1]
    %v330 = vlaneseq
    %v331 = vshrl.u32 %v330, 7
    %v332 = vsub.s32 0, %v331
    %v333 = vrot.slane %v328, %v332
    %vm335 = vcmask 64512
    %v337 = vsel %vm335, %v317, 0
    %v340 = vsel %vm335, %v318, 0
    %342 = vmatprep.subr.mxu0 0.0
    %343 = vmatpush1.msra.mxu0 0.0
    %344 = vmatprep.subr.mxu0 0.0
    %345 = vmatpush1.msra.mxu0 0.0
    %346 = vmatprep.subr.mxu0 0.0
    %347 = vmatpush1.msra.mxu0 0.0
    %348 = vmatprep.subr.mxu0 0.0
    %349 = vmatpush1.msra.mxu0 0.0
    %350 = vmatprep.subr.mxu0 0.0
    %351 = vmatpush1.msra.mxu0 0.0
    %352 = vmatprep.subr.mxu0 0.0
    %353 = vmatpush1.msra.mxu0 0.0
    %354 = vmatprep.subr.mxu0 0.0
    %355 = vmatpush1.msra.mxu0 0.0
    %356 = vmatprep.subr.mxu0 0.0
    %357 = vmatpush1.msra.mxu0 0.0
    %358 = vmatprep.subr.mxu0 0.0
    %359 = vmatpush1.msra.mxu0 0.0
    %360 = vmatprep.subr.mxu0 0.0
    %361 = vmatpush1.msra.mxu0 0.0
    %362 = vmatprep.subr.mxu0 0.0
    %363 = vmatpush1.msra.mxu0 0.0
    %364 = vmatprep.subr.mxu0 0.0
    %365 = vmatpush1.msra.mxu0 0.0
    %366 = vmatprep.subr.mxu0 0.0
    %367 = vmatpush1.msra.mxu0 0.0
    %368 = vmatprep.subr.mxu0 0.0
    %369 = vmatpush1.msra.mxu0 0.0
    %370 = vmatprep.subr.mxu0 0.0
    %371 = vmatpush1.msra.mxu0 0.0
    %372 = vmatprep.subr.mxu0 0.0
    %373 = vmatpush1.msra.mxu0 %v327
    %374 = vmatprep.subr.mxu0 0.0
    %375 = vmatpush2.msra.mxu0 0.0
    %376 = vmatprep.subr.mxu0 0.0
    %377 = vmatpush2.msra.mxu0 0.0
    %378 = vmatprep.subr.mxu0 0.0
    %379 = vmatpush2.msra.mxu0 0.0
    %380 = vmatprep.subr.mxu0 0.0
    %381 = vmatpush2.msra.mxu0 0.0
    %382 = vmatprep.subr.mxu0 0.0
    %383 = vmatpush2.msra.mxu0 0.0
    %384 = vmatprep.subr.mxu0 0.0
    %385 = vmatpush2.msra.mxu0 0.0
    %386 = vmatprep.subr.mxu0 0.0
    %387 = vmatpush2.msra.mxu0 0.0
    %388 = vmatprep.subr.mxu0 0.0
    %389 = vmatpush2.msra.mxu0 0.0
    %390 = vmatprep.subr.mxu0 0.0
    %391 = vmatpush2.msra.mxu0 0.0
    %392 = vmatprep.subr.mxu0 0.0
    %393 = vmatpush2.msra.mxu0 0.0
    %394 = vmatprep.subr.mxu0 0.0
    %395 = vmatpush2.msra.mxu0 0.0
    %396 = vmatprep.subr.mxu0 0.0
    %397 = vmatpush2.msra.mxu0 0.0
    %398 = vmatprep.subr.mxu0 0.0
    %399 = vmatpush2.msra.mxu0 0.0
    %400 = vmatprep.subr.mxu0 0.0
    %401 = vmatpush2.msra.mxu0 0.0
    %402 = vmatprep.subr.mxu0 0.0
    %403 = vmatpush2.msra.mxu0 0.0
    %404 = vmatprep.subr.mxu0 0.0
    %405 = vmatpush2.msra.mxu0 0.0
    %406 = vmatprep.mubr.f32.mxu0 0.0
    %407 = vmatmul.mubr.f32.gmra.mxu0 %v337
    %v408 = vpop.f32.mrf.mxu0
    %v409 = vadd.f32 %v333, %v408
    %v410 = vpop.f32.mrf.mxu0
    %411 = vmatprep.mubr.f32.mxu0 0.0
    %412 = vmatmul.mubr.f32.gmra.mxu0 %v340
    %v413 = vpop.f32.mrf.mxu0
    %v414 = vadd.f32 %v333, %v413
    %v415 = vpop.f32.mrf.mxu0
    %416 = vdwg.mxu0
    %v419 = vunpack.c.l.b16 %v313
    %v420 = vunpack.c.l.b16 %v314
    %v421 = vpack.c.b16 %v420, %v419
    %vm422 = vcmask 72704
    %v424 = vsel %vm422, %v421, 0
    %vm426 = vcmask 1043456
    %vm427 = vcmask 1044480
    %v428 = vsel %vm426, 4294967295, 65535
    %v429 = vsel %vm427, %v428, 0
    %v431 = vand.u32 %v326, %v429
    %433 = vmatprep.subr.bf16.mxu0 0
    %434 = vmatpush1.bf16.msra.mxu0 0
    %435 = vmatprep.subr.bf16.mxu0 0
    %436 = vmatpush1.bf16.msra.mxu0 0
    %437 = vmatprep.subr.bf16.mxu0 0
    %438 = vmatpush1.bf16.msra.mxu0 0
    %439 = vmatprep.subr.bf16.mxu0 0
    %440 = vmatpush1.bf16.msra.mxu0 0
    %441 = vmatprep.subr.bf16.mxu0 0
    %442 = vmatpush1.bf16.msra.mxu0 0
    %443 = vmatprep.subr.bf16.mxu0 0
    %444 = vmatpush1.bf16.msra.mxu0 0
    %445 = vmatprep.subr.bf16.mxu0 0
    %446 = vmatpush1.bf16.msra.mxu0 0
    %447 = vmatprep.subr.bf16.mxu0 0
    %448 = vmatpush1.bf16.msra.mxu0 %v431
    %449 = vmatprep.subr.bf16.mxu0 0
    %450 = vmatpush2.bf16.msra.mxu0 0
    %451 = vmatprep.subr.bf16.mxu0 0
    %452 = vmatpush2.bf16.msra.mxu0 0
    %453 = vmatprep.subr.bf16.mxu0 0
    %454 = vmatpush2.bf16.msra.mxu0 0
    %455 = vmatprep.subr.bf16.mxu0 0
    %456 = vmatpush2.bf16.msra.mxu0 0
    %457 = vmatprep.subr.bf16.mxu0 0
    %458 = vmatpush2.bf16.msra.mxu0 0
    %459 = vmatprep.subr.bf16.mxu0 0
    %460 = vmatpush2.bf16.msra.mxu0 0
    %461 = vmatprep.subr.bf16.mxu0 0
    %462 = vmatpush2.bf16.msra.mxu0 0
    %463 = vmatprep.subr.bf16.mxu0 0
    %464 = vmatpush2.bf16.msra.mxu0 0
    %465 = vmatprep.mubr.bf16.mxu0 0
    %466 = vmatmul.mubr.bf16.gmra.mxu0 %v424
    %v467 = vpop.f32.mrf.mxu0
    %v468 = vadd.f32 %v409, %v467
    %v469 = vpop.f32.mrf.mxu0
    %v470 = vpop.f32.mrf.mxu0
    %v471 = vadd.f32 %v414, %v470
    %v472 = vpop.f32.mrf.mxu0
    %473 = vdwg.mxu0
    %v474 = vmax.f32 %v468, 0.0
    %v475 = vmax.f32 %v471, 0.0
    %v476 = vpack.c.bf16 %v475, %v474
    %v479 = vunpack.c.l.b16 %v315
    %v480 = vunpack.c.l.b16 %v316
    %v481 = vpack.c.b16 %v480, %v479
    %483 = vxpose.xlu0.c.b16.start [1/8] %v481, 128
    %484 = vxpose.xlu0.c.b16.cont [2/8] 0, 128
    %485 = vxpose.xlu0.c.b16.cont [3/8] 0, 128
    %486 = vxpose.xlu0.c.b16.cont [4/8] 0, 128
    %487 = vxpose.xlu0.c.b16.cont [5/8] 0, 128
    %488 = vxpose.xlu0.c.b16.cont [6/8] 0, 128
    %489 = vxpose.xlu0.c.b16.cont [7/8] 0, 128
    %490 = vxpose.xlu0.c.b16.end [8/8] 0, 128
    %v491 = vpop.trf.xlu0
    %v492 = vpop.trf.xlu0
    %v493 = vpop.trf.xlu0
    %v494 = vpop.trf.xlu0
    %v495 = vpop.trf.xlu0
    %v496 = vpop.trf.xlu0
    %v497 = vpop.trf.xlu0
    %v498 = vpop.trf.xlu0
    %v500 = vsel %vm321, %v491, 0
    %vm502 = vcmask 1045504
    %v504 = vsel %vm502, %v476, 0
    %506 = vmatprep.subr.bf16.mxu0 0
    %507 = vmatpush1.bf16.msra.mxu0 0
    %508 = vmatprep.subr.bf16.mxu0 0
    %509 = vmatpush1.bf16.msra.mxu0 0
    %510 = vmatprep.subr.bf16.mxu0 0
    %511 = vmatpush1.bf16.msra.mxu0 0
    %512 = vmatprep.subr.bf16.mxu0 0
    %513 = vmatpush1.bf16.msra.mxu0 0
    %514 = vmatprep.subr.bf16.mxu0 0
    %515 = vmatpush1.bf16.msra.mxu0 0
    %516 = vmatprep.subr.bf16.mxu0 0
    %517 = vmatpush1.bf16.msra.mxu0 0
    %518 = vmatprep.subr.bf16.mxu0 0
    %519 = vmatpush1.bf16.msra.mxu0 0
    %520 = vmatprep.subr.bf16.mxu0 0
    %521 = vmatpush1.bf16.msra.mxu0 %v504
    %522 = vmatprep.subr.bf16.mxu0 0
    %523 = vmatpush2.bf16.msra.mxu0 0
    %524 = vmatprep.subr.bf16.mxu0 0
    %525 = vmatpush2.bf16.msra.mxu0 0
    %526 = vmatprep.subr.bf16.mxu0 0
    %527 = vmatpush2.bf16.msra.mxu0 0
    %528 = vmatprep.subr.bf16.mxu0 0
    %529 = vmatpush2.bf16.msra.mxu0 0
    %530 = vmatprep.subr.bf16.mxu0 0
    %531 = vmatpush2.bf16.msra.mxu0 0
    %532 = vmatprep.subr.bf16.mxu0 0
    %533 = vmatpush2.bf16.msra.mxu0 0
    %534 = vmatprep.subr.bf16.mxu0 0
    %535 = vmatpush2.bf16.msra.mxu0 0
    %536 = vmatprep.subr.bf16.mxu0 0
    %537 = vmatpush2.bf16.msra.mxu0 0
    %538 = vmatprep.mubr.bf16.mxu0 0
    %539 = vmatmul.mubr.bf16.gmra.mxu0 %v500
    %v540 = vpop.f32.mrf.mxu0
    %v541 = vadd.f32 0.0, %v540
    %v542 = vpop.f32.mrf.mxu0
    %v543 = vpop.f32.mrf.mxu0
    %v544 = vadd.f32 0.0, %v543
    %v545 = vpop.f32.mrf.mxu0
    %546 = vdwg.mxu0
    %v547 = vadd.f32 %v319, %v541
    %v548 = vadd.f32 %v320, %v544
    %v549 = vld [vmem:[%s7] sm:$0xff]
    %v550 = vld [vmem:[%s7 + $0x8] sm:$0xf]
    %v551 = vld [vmem:[#allocation12] sm:$0x1]
    %v553 = vlaneseq
    %v554 = vshrl.u32 %v553, 7
    %v555 = vsub.s32 0, %v554
    %v556 = vrot.slane %v551, %v555
    %v559 = vsel %vm321, %v547, 0
    %v562 = vsel %vm321, %v548, 0
    %v565 = vsel %vm426, %v550, 0
    %567 = vmatprep.subr.mxu0 0.0
    %568 = vmatpush1.msra.mxu0 0.0
    %569 = vmatprep.subr.mxu0 0.0
    %570 = vmatpush1.msra.mxu0 0.0
    %571 = vmatprep.subr.mxu0 0.0
    %572 = vmatpush1.msra.mxu0 0.0
    %573 = vmatprep.subr.mxu0 0.0
    %574 = vmatpush1.msra.mxu0 0.0
    %575 = vmatprep.subr.mxu0 0.0
    %576 = vmatpush1.msra.mxu0 0.0
    %577 = vmatprep.subr.mxu0 0.0
    %578 = vmatpush1.msra.mxu0 0.0
    %579 = vmatprep.subr.mxu0 0.0
    %580 = vmatpush1.msra.mxu0 0.0
    %581 = vmatprep.subr.mxu0 0.0
    %582 = vmatpush1.msra.mxu0 0.0
    %583 = vmatprep.subr.mxu0 0.0
    %584 = vmatpush1.msra.mxu0 0.0
    %585 = vmatprep.subr.mxu0 0.0
    %586 = vmatpush1.msra.mxu0 0.0
    %587 = vmatprep.subr.mxu0 0.0
    %588 = vmatpush1.msra.mxu0 0.0
    %589 = vmatprep.subr.mxu0 0.0
    %590 = vmatpush1.msra.mxu0 0.0
    %591 = vmatprep.subr.mxu0 0.0
    %592 = vmatpush1.msra.mxu0 0.0
    %593 = vmatprep.subr.mxu0 0.0
    %594 = vmatpush1.msra.mxu0 0.0
    %595 = vmatprep.subr.mxu0 0.0
    %596 = vmatpush1.msra.mxu0 %v565
    %597 = vmatprep.subr.mxu0 0.0
    %598 = vmatpush1.msra.mxu0 %v549
    %599 = vmatprep.subr.mxu0 0.0
    %600 = vmatpush2.msra.mxu0 0.0
    %601 = vmatprep.subr.mxu0 0.0
    %602 = vmatpush2.msra.mxu0 0.0
    %603 = vmatprep.subr.mxu0 0.0
    %604 = vmatpush2.msra.mxu0 0.0
    %605 = vmatprep.subr.mxu0 0.0
    %606 = vmatpush2.msra.mxu0 0.0
    %607 = vmatprep.subr.mxu0 0.0
    %608 = vmatpush2.msra.mxu0 0.0
    %609 = vmatprep.subr.mxu0 0.0
    %610 = vmatpush2.msra.mxu0 0.0
    %611 = vmatprep.subr.mxu0 0.0
    %612 = vmatpush2.msra.mxu0 0.0
    %613 = vmatprep.subr.mxu0 0.0
    %614 = vmatpush2.msra.mxu0 0.0
    %615 = vmatprep.subr.mxu0 0.0
    %616 = vmatpush2.msra.mxu0 0.0
    %617 = vmatprep.subr.mxu0 0.0
    %618 = vmatpush2.msra.mxu0 0.0
    %619 = vmatprep.subr.mxu0 0.0
    %620 = vmatpush2.msra.mxu0 0.0
    %621 = vmatprep.subr.mxu0 0.0
    %622 = vmatpush2.msra.mxu0 0.0
    %623 = vmatprep.subr.mxu0 0.0
    %624 = vmatpush2.msra.mxu0 0.0
    %625 = vmatprep.subr.mxu0 0.0
    %626 = vmatpush2.msra.mxu0 0.0
    %627 = vmatprep.subr.mxu0 0.0
    %628 = vmatpush2.msra.mxu0 0.0
    %629 = vmatprep.subr.mxu0 0.0
    %630 = vmatpush2.msra.mxu0 0.0
    %631 = vmatprep.mubr.f32.mxu0 0.0
    %632 = vmatmul.mubr.f32.gmra.mxu0 %v559
    %v633 = vpop.f32.mrf.mxu0
    %v634 = vadd.f32 %v556, %v633
    %v635 = vpop.f32.mrf.mxu0
    %636 = vmatprep.mubr.f32.mxu0 0.0
    %637 = vmatmul.mubr.f32.gmra.mxu0 %v562
    %v638 = vpop.f32.mrf.mxu0
    %v639 = vadd.f32 %v556, %v638
    %v640 = vpop.f32.mrf.mxu0
    %641 = vdwg.mxu0
    %v642 = vmax.f32 %v634, 0.0
    %v643 = vmax.f32 %v639, 0.0
    %v644 = vld [vmem:[#allocation13] sm:$0xff]
    %v645 = vld [vmem:[#allocation13 + $0x8] sm:$0xff]
    %v646 = vld [vmem:[#allocation15] sm:$0x1]
    %v648 = vlaneseq
    %v649 = vshrl.u32 %v648, 7
    %v650 = vsub.s32 0, %v649
    %v651 = vrot.slane %v646, %v650
    %vm653 = vcmask 130048
    %v655 = vsel %vm653, %v642, 0
    %v658 = vsel %vm653, %v643, 0
    %660 = vmatprep.subr.mxu0 0.0
    %661 = vmatpush1.msra.mxu0 0.0
    %662 = vmatprep.subr.mxu0 0.0
    %663 = vmatpush1.msra.mxu0 0.0
    %664 = vmatprep.subr.mxu0 0.0
    %665 = vmatpush1.msra.mxu0 0.0
    %666 = vmatprep.subr.mxu0 0.0
    %667 = vmatpush1.msra.mxu0 0.0
    %668 = vmatprep.subr.mxu0 0.0
    %669 = vmatpush1.msra.mxu0 0.0
    %670 = vmatprep.subr.mxu0 0.0
    %671 = vmatpush1.msra.mxu0 0.0
    %672 = vmatprep.subr.mxu0 0.0
    %673 = vmatpush1.msra.mxu0 0.0
    %674 = vmatprep.subr.mxu0 0.0
    %675 = vmatpush1.msra.mxu0 0.0
    %676 = vmatprep.subr.mxu0 0.0
    %677 = vmatpush1.msra.mxu0 0.0
    %678 = vmatprep.subr.mxu0 0.0
    %679 = vmatpush1.msra.mxu0 0.0
    %680 = vmatprep.subr.mxu0 0.0
    %681 = vmatpush1.msra.mxu0 0.0
    %682 = vmatprep.subr.mxu0 0.0
    %683 = vmatpush1.msra.mxu0 0.0
    %684 = vmatprep.subr.mxu0 0.0
    %685 = vmatpush1.msra.mxu0 0.0
    %686 = vmatprep.subr.mxu0 0.0
    %687 = vmatpush1.msra.mxu0 0.0
    %688 = vmatprep.subr.mxu0 0.0
    %689 = vmatpush1.msra.mxu0 %v645
    %690 = vmatprep.subr.mxu0 0.0
    %691 = vmatpush1.msra.mxu0 %v644
    %692 = vmatprep.subr.mxu0 0.0
    %693 = vmatpush2.msra.mxu0 0.0
    %694 = vmatprep.subr.mxu0 0.0
    %695 = vmatpush2.msra.mxu0 0.0
    %696 = vmatprep.subr.mxu0 0.0
    %697 = vmatpush2.msra.mxu0 0.0
    %698 = vmatprep.subr.mxu0 0.0
    %699 = vmatpush2.msra.mxu0 0.0
    %700 = vmatprep.subr.mxu0 0.0
    %701 = vmatpush2.msra.mxu0 0.0
    %702 = vmatprep.subr.mxu0 0.0
    %703 = vmatpush2.msra.mxu0 0.0
    %704 = vmatprep.subr.mxu0 0.0
    %705 = vmatpush2.msra.mxu0 0.0
    %706 = vmatprep.subr.mxu0 0.0
    %707 = vmatpush2.msra.mxu0 0.0
    %708 = vmatprep.subr.mxu0 0.0
    %709 = vmatpush2.msra.mxu0 0.0
    %710 = vmatprep.subr.mxu0 0.0
    %711 = vmatpush2.msra.mxu0 0.0
    %712 = vmatprep.subr.mxu0 0.0
    %713 = vmatpush2.msra.mxu0 0.0
    %714 = vmatprep.subr.mxu0 0.0
    %715 = vmatpush2.msra.mxu0 0.0
    %716 = vmatprep.subr.mxu0 0.0
    %717 = vmatpush2.msra.mxu0 0.0
    %718 = vmatprep.subr.mxu0 0.0
    %719 = vmatpush2.msra.mxu0 0.0
    %720 = vmatprep.subr.mxu0 0.0
    %721 = vmatpush2.msra.mxu0 0.0
    %722 = vmatprep.subr.mxu0 0.0
    %723 = vmatpush2.msra.mxu0 0.0
    %724 = vmatprep.mubr.f32.mxu0 0.0
    %725 = vmatmul.mubr.f32.gmra.mxu0 %v655
    %v726 = vpop.f32.mrf.mxu0
    %v727 = vadd.f32 %v651, %v726
    %v728 = vpop.f32.mrf.mxu0
    %729 = vmatprep.mubr.f32.mxu0 0.0
    %730 = vmatmul.mubr.f32.gmra.mxu0 %v658
    %v731 = vpop.f32.mrf.mxu0
    %v732 = vadd.f32 %v651, %v731
    %v733 = vpop.f32.mrf.mxu0
    %734 = vdwg.mxu0
    %v735 = vld [vmem:[#allocation16] sm:$0xff]
    %v736 = vld [vmem:[#allocation16 + $0x8] sm:$0xf]
    %v737 = vld [vmem:[#allocation18] sm:$0x1]
    %v739 = vlaneseq
    %v740 = vshrl.u32 %v739, 7
    %v741 = vsub.s32 0, %v740
    %v742 = vrot.slane %v737, %v741
    %v745 = vsel %vm321, %v319, 0
    %v748 = vsel %vm321, %v320, 0
    %v751 = vsel %vm426, %v736, 0
    %753 = vmatprep.subr.mxu0 0.0
    %754 = vmatpush1.msra.mxu0 0.0
    %755 = vmatprep.subr.mxu0 0.0
    %756 = vmatpush1.msra.mxu0 0.0
    %757 = vmatprep.subr.mxu0 0.0
    %758 = vmatpush1.msra.mxu0 0.0
    %759 = vmatprep.subr.mxu0 0.0
    %760 = vmatpush1.msra.mxu0 0.0
    %761 = vmatprep.subr.mxu0 0.0
    %762 = vmatpush1.msra.mxu0 0.0
    %763 = vmatprep.subr.mxu0 0.0
    %764 = vmatpush1.msra.mxu0 0.0
    %765 = vmatprep.subr.mxu0 0.0
    %766 = vmatpush1.msra.mxu0 0.0
    %767 = vmatprep.subr.mxu0 0.0
    %768 = vmatpush1.msra.mxu0 0.0
    %769 = vmatprep.subr.mxu0 0.0
    %770 = vmatpush1.msra.mxu0 0.0
    %771 = vmatprep.subr.mxu0 0.0
    %772 = vmatpush1.msra.mxu0 0.0
    %773 = vmatprep.subr.mxu0 0.0
    %774 = vmatpush1.msra.mxu0 0.0
    %775 = vmatprep.subr.mxu0 0.0
    %776 = vmatpush1.msra.mxu0 0.0
    %777 = vmatprep.subr.mxu0 0.0
    %778 = vmatpush1.msra.mxu0 0.0
    %779 = vmatprep.subr.mxu0 0.0
    %780 = vmatpush1.msra.mxu0 0.0
    %781 = vmatprep.subr.mxu0 0.0
    %782 = vmatpush1.msra.mxu0 %v751
    %783 = vmatprep.subr.mxu0 0.0
    %784 = vmatpush1.msra.mxu0 %v735
    %785 = vmatprep.subr.mxu0 0.0
    %786 = vmatpush2.msra.mxu0 0.0
    %787 = vmatprep.subr.mxu0 0.0
    %788 = vmatpush2.msra.mxu0 0.0
    %789 = vmatprep.subr.mxu0 0.0
    %790 = vmatpush2.msra.mxu0 0.0
    %791 = vmatprep.subr.mxu0 0.0
    %792 = vmatpush2.msra.mxu0 0.0
    %793 = vmatprep.subr.mxu0 0.0
    %794 = vmatpush2.msra.mxu0 0.0
    %795 = vmatprep.subr.mxu0 0.0
    %796 = vmatpush2.msra.mxu0 0.0
    %797 = vmatprep.subr.mxu0 0.0
    %798 = vmatpush2.msra.mxu0 0.0
    %799 = vmatprep.subr.mxu0 0.0
    %800 = vmatpush2.msra.mxu0 0.0
    %801 = vmatprep.subr.mxu0 0.0
    %802 = vmatpush2.msra.mxu0 0.0
    %803 = vmatprep.subr.mxu0 0.0
    %804 = vmatpush2.msra.mxu0 0.0
    %805 = vmatprep.subr.mxu0 0.0
    %806 = vmatpush2.msra.mxu0 0.0
    %807 = vmatprep.subr.mxu0 0.0
    %808 = vmatpush2.msra.mxu0 0.0
    %809 = vmatprep.subr.mxu0 0.0
    %810 = vmatpush2.msra.mxu0 0.0
    %811 = vmatprep.subr.mxu0 0.0
    %812 = vmatpush2.msra.mxu0 0.0
    %813 = vmatprep.subr.mxu0 0.0
    %814 = vmatpush2.msra.mxu0 0.0
    %815 = vmatprep.subr.mxu0 0.0
    %816 = vmatpush2.msra.mxu0 0.0
    %817 = vmatprep.mubr.f32.mxu0 0.0
    %818 = vmatmul.mubr.f32.gmra.mxu0 %v745
    %v819 = vpop.f32.mrf.mxu0
    %v820 = vadd.f32 %v742, %v819
    %v821 = vpop.f32.mrf.mxu0
    %822 = vmatprep.mubr.f32.mxu0 0.0
    %823 = vmatmul.mubr.f32.gmra.mxu0 %v748
    %v824 = vpop.f32.mrf.mxu0
    %v825 = vadd.f32 %v742, %v824
    %v826 = vpop.f32.mrf.mxu0
    %827 = vdwg.mxu0
    %v828 = vstv %s325
    %v829 = vmul.f32 %v828, %v820
    %v830 = vmul.f32 %v828, %v825
    %s831 = ssub.f32 1.0, %s325
    %v832 = vstv %s831
    %v833 = vmul.f32 %v832, %v727
    %v834 = vmul.f32 %v832, %v732
    %v835 = vadd.f32 %v829, %v833
    %v836 = vadd.f32 %v830, %v834
    %839 = vrot.lane.b32.xlu0 %v835, 12
    %v840 = vpop.permute.xlu0 %839
    %841 = vrot.lane.b32.xlu0 %v836, 12
    %v842 = vpop.permute.xlu0 %841
    %vm845 = vcmask 228448
    %846 = vst.msk [vmem:[#allocation33] sm:$0xff] %vm845, %v840
    %vm847 = vcmask 221280
    %848 = vst.msk [vmem:[#allocation33 + $0x8] sm:$0x1] %vm847, %v842
    %s849 = sld [smem:[#allocation8 + $0x1]]
    %v850 = vpack.c.bf16 %v836, %v835
    %v851 = vld [vmem:[#allocation19] sm:$0xff]
    %v852 = vld [vmem:[#allocation21] sm:$0x1]
    %v854 = vlaneseq
    %v855 = vshrl.u32 %v854, 7
    %v856 = vsub.s32 0, %v855
    %v857 = vrot.slane %v852, %v856
    %859 = vmatprep.subr.mxu0 0.0
    %860 = vmatpush1.msra.mxu0 0.0
    %861 = vmatprep.subr.mxu0 0.0
    %862 = vmatpush1.msra.mxu0 0.0
    %863 = vmatprep.subr.mxu0 0.0
    %864 = vmatpush1.msra.mxu0 0.0
    %865 = vmatprep.subr.mxu0 0.0
    %866 = vmatpush1.msra.mxu0 0.0
    %867 = vmatprep.subr.mxu0 0.0
    %868 = vmatpush1.msra.mxu0 0.0
    %869 = vmatprep.subr.mxu0 0.0
    %870 = vmatpush1.msra.mxu0 0.0
    %871 = vmatprep.subr.mxu0 0.0
    %872 = vmatpush1.msra.mxu0 0.0
    %873 = vmatprep.subr.mxu0 0.0
    %874 = vmatpush1.msra.mxu0 0.0
    %875 = vmatprep.subr.mxu0 0.0
    %876 = vmatpush1.msra.mxu0 0.0
    %877 = vmatprep.subr.mxu0 0.0
    %878 = vmatpush1.msra.mxu0 0.0
    %879 = vmatprep.subr.mxu0 0.0
    %880 = vmatpush1.msra.mxu0 0.0
    %881 = vmatprep.subr.mxu0 0.0
    %882 = vmatpush1.msra.mxu0 0.0
    %883 = vmatprep.subr.mxu0 0.0
    %884 = vmatpush1.msra.mxu0 0.0
    %885 = vmatprep.subr.mxu0 0.0
    %886 = vmatpush1.msra.mxu0 0.0
    %887 = vmatprep.subr.mxu0 0.0
    %888 = vmatpush1.msra.mxu0 0.0
    %889 = vmatprep.subr.mxu0 0.0
    %890 = vmatpush1.msra.mxu0 %v851
    %891 = vmatprep.subr.mxu0 0.0
    %892 = vmatpush2.msra.mxu0 0.0
    %893 = vmatprep.subr.mxu0 0.0
    %894 = vmatpush2.msra.mxu0 0.0
    %895 = vmatprep.subr.mxu0 0.0
    %896 = vmatpush2.msra.mxu0 0.0
    %897 = vmatprep.subr.mxu0 0.0
    %898 = vmatpush2.msra.mxu0 0.0
    %899 = vmatprep.subr.mxu0 0.0
    %900 = vmatpush2.msra.mxu0 0.0
    %901 = vmatprep.subr.mxu0 0.0
    %902 = vmatpush2.msra.mxu0 0.0
    %903 = vmatprep.subr.mxu0 0.0
    %904 = vmatpush2.msra.mxu0 0.0
    %905 = vmatprep.subr.mxu0 0.0
    %906 = vmatpush2.msra.mxu0 0.0
    %907 = vmatprep.subr.mxu0 0.0
    %908 = vmatpush2.msra.mxu0 0.0
    %909 = vmatprep.subr.mxu0 0.0
    %910 = vmatpush2.msra.mxu0 0.0
    %911 = vmatprep.subr.mxu0 0.0
    %912 = vmatpush2.msra.mxu0 0.0
    %913 = vmatprep.subr.mxu0 0.0
    %914 = vmatpush2.msra.mxu0 0.0
    %915 = vmatprep.subr.mxu0 0.0
    %916 = vmatpush2.msra.mxu0 0.0
    %917 = vmatprep.subr.mxu0 0.0
    %918 = vmatpush2.msra.mxu0 0.0
    %919 = vmatprep.subr.mxu0 0.0
    %920 = vmatpush2.msra.mxu0 0.0
    %921 = vmatprep.subr.mxu0 0.0
    %922 = vmatpush2.msra.mxu0 0.0
    %923 = vmatprep.mubr.f32.mxu0 0.0
    %924 = vmatmul.mubr.f32.gmra.mxu0 %v337
    %v925 = vpop.f32.mrf.mxu0
    %v926 = vadd.f32 %v857, %v925
    %v927 = vpop.f32.mrf.mxu0
    %928 = vmatprep.mubr.f32.mxu0 0.0
    %929 = vmatmul.mubr.f32.gmra.mxu0 %v340
    %v930 = vpop.f32.mrf.mxu0
    %v931 = vadd.f32 %v857, %v930
    %v932 = vpop.f32.mrf.mxu0
    %933 = vdwg.mxu0
    %v935 = vand.u32 %v850, %v429
    %937 = vmatprep.subr.bf16.mxu0 0
    %938 = vmatpush1.bf16.msra.mxu0 0
    %939 = vmatprep.subr.bf16.mxu0 0
    %940 = vmatpush1.bf16.msra.mxu0 0
    %941 = vmatprep.subr.bf16.mxu0 0
    %942 = vmatpush1.bf16.msra.mxu0 0
    %943 = vmatprep.subr.bf16.mxu0 0
    %944 = vmatpush1.bf16.msra.mxu0 0
    %945 = vmatprep.subr.bf16.mxu0 0
    %946 = vmatpush1.bf16.msra.mxu0 0
    %947 = vmatprep.subr.bf16.mxu0 0
    %948 = vmatpush1.bf16.msra.mxu0 0
    %949 = vmatprep.subr.bf16.mxu0 0
    %950 = vmatpush1.bf16.msra.mxu0 0
    %951 = vmatprep.subr.bf16.mxu0 0
    %952 = vmatpush1.bf16.msra.mxu0 %v935
    %953 = vmatprep.subr.bf16.mxu0 0
    %954 = vmatpush2.bf16.msra.mxu0 0
    %955 = vmatprep.subr.bf16.mxu0 0
    %956 = vmatpush2.bf16.msra.mxu0 0
    %957 = vmatprep.subr.bf16.mxu0 0
    %958 = vmatpush2.bf16.msra.mxu0 0
    %959 = vmatprep.subr.bf16.mxu0 0
    %960 = vmatpush2.bf16.msra.mxu0 0
    %961 = vmatprep.subr.bf16.mxu0 0
    %962 = vmatpush2.bf16.msra.mxu0 0
    %963 = vmatprep.subr.bf16.mxu0 0
    %964 = vmatpush2.bf16.msra.mxu0 0
    %965 = vmatprep.subr.bf16.mxu0 0
    %966 = vmatpush2.bf16.msra.mxu0 0
    %967 = vmatprep.subr.bf16.mxu0 0
    %968 = vmatpush2.bf16.msra.mxu0 0
    %969 = vmatprep.mubr.bf16.mxu0 0
    %970 = vmatmul.mubr.bf16.gmra.mxu0 %v424
    %v971 = vpop.f32.mrf.mxu0
    %v972 = vadd.f32 %v926, %v971
    %v973 = vpop.f32.mrf.mxu0
    %v974 = vpop.f32.mrf.mxu0
    %v975 = vadd.f32 %v931, %v974
    %v976 = vpop.f32.mrf.mxu0
    %977 = vdwg.mxu0
    %v978 = vmax.f32 %v972, 0.0
    %v979 = vmax.f32 %v975, 0.0
    %v980 = vpack.c.bf16 %v979, %v978
    %v982 = vsel %vm502, %v980, 0
    %984 = vmatprep.subr.bf16.mxu0 0
    %985 = vmatpush1.bf16.msra.mxu0 0
    %986 = vmatprep.subr.bf16.mxu0 0
    %987 = vmatpush1.bf16.msra.mxu0 0
    %988 = vmatprep.subr.bf16.mxu0 0
    %989 = vmatpush1.bf16.msra.mxu0 0
    %990 = vmatprep.subr.bf16.mxu0 0
    %991 = vmatpush1.bf16.msra.mxu0 0
    %992 = vmatprep.subr.bf16.mxu0 0
    %993 = vmatpush1.bf16.msra.mxu0 0
    %994 = vmatprep.subr.bf16.mxu0 0
    %995 = vmatpush1.bf16.msra.mxu0 0
    %996 = vmatprep.subr.bf16.mxu0 0
    %997 = vmatpush1.bf16.msra.mxu0 0
    %998 = vmatprep.subr.bf16.mxu0 0
    %999 = vmatpush1.bf16.msra.mxu0 %v982
    %1000 = vmatprep.subr.bf16.mxu0 0
    %1001 = vmatpush2.bf16.msra.mxu0 0
    %1002 = vmatprep.subr.bf16.mxu0 0
    %1003 = vmatpush2.bf16.msra.mxu0 0
    %1004 = vmatprep.subr.bf16.mxu0 0
    %1005 = vmatpush2.bf16.msra.mxu0 0
    %1006 = vmatprep.subr.bf16.mxu0 0
    %1007 = vmatpush2.bf16.msra.mxu0 0
    %1008 = vmatprep.subr.bf16.mxu0 0
    %1009 = vmatpush2.bf16.msra.mxu0 0
    %1010 = vmatprep.subr.bf16.mxu0 0
    %1011 = vmatpush2.bf16.msra.mxu0 0
    %1012 = vmatprep.subr.bf16.mxu0 0
    %1013 = vmatpush2.bf16.msra.mxu0 0
    %1014 = vmatprep.subr.bf16.mxu0 0
    %1015 = vmatpush2.bf16.msra.mxu0 0
    %1016 = vmatprep.mubr.bf16.mxu0 0
    %1017 = vmatmul.mubr.bf16.gmra.mxu0 %v500
    %v1018 = vpop.f32.mrf.mxu0
    %v1019 = vadd.f32 0.0, %v1018
    %v1020 = vpop.f32.mrf.mxu0
    %v1021 = vpop.f32.mrf.mxu0
    %v1022 = vadd.f32 0.0, %v1021
    %v1023 = vpop.f32.mrf.mxu0
    %1024 = vdwg.mxu0
    %v1025 = vadd.f32 %v835, %v1019
    %v1026 = vadd.f32 %v836, %v1022
    %v1027 = vld [vmem:[%s15] sm:$0xff]
    %v1028 = vld [vmem:[%s15 + $0x8] sm:$0xff]
    %v1029 = vld [vmem:[#allocation22] sm:$0x1]
    %v1031 = vlaneseq
    %v1032 = vshrl.u32 %v1031, 7
    %v1033 = vsub.s32 0, %v1032
    %v1034 = vrot.slane %v1029, %v1033
    %v1037 = vsel %vm653, %v1025, 0
    %v1040 = vsel %vm653, %v1026, 0
    %1042 = vmatprep.subr.mxu0 0.0
    %1043 = vmatpush1.msra.mxu0 0.0
    %1044 = vmatprep.subr.mxu0 0.0
    %1045 = vmatpush1.msra.mxu0 0.0
    %1046 = vmatprep.subr.mxu0 0.0
    %1047 = vmatpush1.msra.mxu0 0.0
    %1048 = vmatprep.subr.mxu0 0.0
    %1049 = vmatpush1.msra.mxu0 0.0
    %1050 = vmatprep.subr.mxu0 0.0
    %1051 = vmatpush1.msra.mxu0 0.0
    %1052 = vmatprep.subr.mxu0 0.0
    %1053 = vmatpush1.msra.mxu0 0.0
    %1054 = vmatprep.subr.mxu0 0.0
    %1055 = vmatpush1.msra.mxu0 0.0
    %1056 = vmatprep.subr.mxu0 0.0
    %1057 = vmatpush1.msra.mxu0 0.0
    %1058 = vmatprep.subr.mxu0 0.0
    %1059 = vmatpush1.msra.mxu0 0.0
    %1060 = vmatprep.subr.mxu0 0.0
    %1061 = vmatpush1.msra.mxu0 0.0
    %1062 = vmatprep.subr.mxu0 0.0
    %1063 = vmatpush1.msra.mxu0 0.0
    %1064 = vmatprep.subr.mxu0 0.0
    %1065 = vmatpush1.msra.mxu0 0.0
    %1066 = vmatprep.subr.mxu0 0.0
    %1067 = vmatpush1.msra.mxu0 0.0
    %1068 = vmatprep.subr.mxu0 0.0
    %1069 = vmatpush1.msra.mxu0 0.0
    %1070 = vmatprep.subr.mxu0 0.0
    %1071 = vmatpush1.msra.mxu0 %v1028
    %1072 = vmatprep.subr.mxu0 0.0
    %1073 = vmatpush1.msra.mxu0 %v1027
    %1074 = vmatprep.subr.mxu0 0.0
    %1075 = vmatpush2.msra.mxu0 0.0
    %1076 = vmatprep.subr.mxu0 0.0
    %1077 = vmatpush2.msra.mxu0 0.0
    %1078 = vmatprep.subr.mxu0 0.0
    %1079 = vmatpush2.msra.mxu0 0.0
    %1080 = vmatprep.subr.mxu0 0.0
    %1081 = vmatpush2.msra.mxu0 0.0
    %1082 = vmatprep.subr.mxu0 0.0
    %1083 = vmatpush2.msra.mxu0 0.0
    %1084 = vmatprep.subr.mxu0 0.0
    %1085 = vmatpush2.msra.mxu0 0.0
    %1086 = vmatprep.subr.mxu0 0.0
    %1087 = vmatpush2.msra.mxu0 0.0
    %1088 = vmatprep.subr.mxu0 0.0
    %1089 = vmatpush2.msra.mxu0 0.0
    %1090 = vmatprep.subr.mxu0 0.0
    %1091 = vmatpush2.msra.mxu0 0.0
    %1092 = vmatprep.subr.mxu0 0.0
    %1093 = vmatpush2.msra.mxu0 0.0
    %1094 = vmatprep.subr.mxu0 0.0
    %1095 = vmatpush2.msra.mxu0 0.0
    %1096 = vmatprep.subr.mxu0 0.0
    %1097 = vmatpush2.msra.mxu0 0.0
    %1098 = vmatprep.subr.mxu0 0.0
    %1099 = vmatpush2.msra.mxu0 0.0
    %1100 = vmatprep.subr.mxu0 0.0
    %1101 = vmatpush2.msra.mxu0 0.0
    %1102 = vmatprep.subr.mxu0 0.0
    %1103 = vmatpush2.msra.mxu0 0.0
    %1104 = vmatprep.subr.mxu0 0.0
    %1105 = vmatpush2.msra.mxu0 0.0
    %1106 = vmatprep.mubr.f32.mxu0 0.0
    %1107 = vmatmul.mubr.f32.gmra.mxu0 %v1037
    %v1108 = vpop.f32.mrf.mxu0
    %v1109 = vadd.f32 %v1034, %v1108
    %v1110 = vpop.f32.mrf.mxu0
    %1111 = vmatprep.mubr.f32.mxu0 0.0
    %1112 = vmatmul.mubr.f32.gmra.mxu0 %v1040
    %v1113 = vpop.f32.mrf.mxu0
    %v1114 = vadd.f32 %v1034, %v1113
    %v1115 = vpop.f32.mrf.mxu0
    %1116 = vdwg.mxu0
    %v1117 = vmax.f32 %v1109, 0.0
    %v1118 = vmax.f32 %v1114, 0.0
    %v1119 = vld [vmem:[#allocation24] sm:$0xff]
    %v1120 = vld [vmem:[#allocation24 + $0x8] sm:$0xff]
    %v1121 = vld [vmem:[#allocation25] sm:$0x1]
    %v1123 = vlaneseq
    %v1124 = vshrl.u32 %v1123, 7
    %v1125 = vsub.s32 0, %v1124
    %v1126 = vrot.slane %v1121, %v1125
    %v1129 = vsel %vm653, %v1117, 0
    %v1132 = vsel %vm653, %v1118, 0
    %1134 = vmatprep.subr.mxu0 0.0
    %1135 = vmatpush1.msra.mxu0 0.0
    %1136 = vmatprep.subr.mxu0 0.0
    %1137 = vmatpush1.msra.mxu0 0.0
    %1138 = vmatprep.subr.mxu0 0.0
    %1139 = vmatpush1.msra.mxu0 0.0
    %1140 = vmatprep.subr.mxu0 0.0
    %1141 = vmatpush1.msra.mxu0 0.0
    %1142 = vmatprep.subr.mxu0 0.0
    %1143 = vmatpush1.msra.mxu0 0.0
    %1144 = vmatprep.subr.mxu0 0.0
    %1145 = vmatpush1.msra.mxu0 0.0
    %1146 = vmatprep.subr.mxu0 0.0
    %1147 = vmatpush1.msra.mxu0 0.0
    %1148 = vmatprep.subr.mxu0 0.0
    %1149 = vmatpush1.msra.mxu0 0.0
    %1150 = vmatprep.subr.mxu0 0.0
    %1151 = vmatpush1.msra.mxu0 0.0
    %1152 = vmatprep.subr.mxu0 0.0
    %1153 = vmatpush1.msra.mxu0 0.0
    %1154 = vmatprep.subr.mxu0 0.0
    %1155 = vmatpush1.msra.mxu0 0.0
    %1156 = vmatprep.subr.mxu0 0.0
    %1157 = vmatpush1.msra.mxu0 0.0
    %1158 = vmatprep.subr.mxu0 0.0
    %1159 = vmatpush1.msra.mxu0 0.0
    %1160 = vmatprep.subr.mxu0 0.0
    %1161 = vmatpush1.msra.mxu0 0.0
    %1162 = vmatprep.subr.mxu0 0.0
    %1163 = vmatpush1.msra.mxu0 %v1120
    %1164 = vmatprep.subr.mxu0 0.0
    %1165 = vmatpush1.msra.mxu0 %v1119
    %1166 = vmatprep.subr.mxu0 0.0
    %1167 = vmatpush2.msra.mxu0 0.0
    %1168 = vmatprep.subr.mxu0 0.0
    %1169 = vmatpush2.msra.mxu0 0.0
    %1170 = vmatprep.subr.mxu0 0.0
    %1171 = vmatpush2.msra.mxu0 0.0
    %1172 = vmatprep.subr.mxu0 0.0
    %1173 = vmatpush2.msra.mxu0 0.0
    %1174 = vmatprep.subr.mxu0 0.0
    %1175 = vmatpush2.msra.mxu0 0.0
    %1176 = vmatprep.subr.mxu0 0.0
    %1177 = vmatpush2.msra.mxu0 0.0
    %1178 = vmatprep.subr.mxu0 0.0
    %1179 = vmatpush2.msra.mxu0 0.0
    %1180 = vmatprep.subr.mxu0 0.0
    %1181 = vmatpush2.msra.mxu0 0.0
    %1182 = vmatprep.subr.mxu0 0.0
    %1183 = vmatpush2.msra.mxu0 0.0
    %1184 = vmatprep.subr.mxu0 0.0
    %1185 = vmatpush2.msra.mxu0 0.0
    %1186 = vmatprep.subr.mxu0 0.0
    %1187 = vmatpush2.msra.mxu0 0.0
    %1188 = vmatprep.subr.mxu0 0.0
    %1189 = vmatpush2.msra.mxu0 0.0
    %1190 = vmatprep.subr.mxu0 0.0
    %1191 = vmatpush2.msra.mxu0 0.0
    %1192 = vmatprep.subr.mxu0 0.0
    %1193 = vmatpush2.msra.mxu0 0.0
    %1194 = vmatprep.subr.mxu0 0.0
    %1195 = vmatpush2.msra.mxu0 0.0
    %1196 = vmatprep.subr.mxu0 0.0
    %1197 = vmatpush2.msra.mxu0 0.0
    %1198 = vmatprep.mubr.f32.mxu0 0.0
    %1199 = vmatmul.mubr.f32.gmra.mxu0 %v1129
    %v1200 = vpop.f32.mrf.mxu0
    %v1201 = vadd.f32 %v1126, %v1200
    %v1202 = vpop.f32.mrf.mxu0
    %1203 = vmatprep.mubr.f32.mxu0 0.0
    %1204 = vmatmul.mubr.f32.gmra.mxu0 %v1132
    %v1205 = vpop.f32.mrf.mxu0
    %v1206 = vadd.f32 %v1126, %v1205
    %v1207 = vpop.f32.mrf.mxu0
    %1208 = vdwg.mxu0
    %v1209 = vstv %s849
    %v1210 = vmul.f32 %v1209, %v835
    %v1211 = vmul.f32 %v1209, %v836
    %s1212 = ssub.f32 1.0, %s849
    %v1213 = vstv %s1212
    %v1214 = vmul.f32 %v1213, %v1201
    %v1215 = vmul.f32 %v1213, %v1206
    %v1216 = vadd.f32 %v1210, %v1214
    %v1217 = vadd.f32 %v1211, %v1215
    %1220 = vrot.lane.b32.xlu0 %v1216, 28
    %v1221 = vpop.permute.xlu0 %1220
    %1222 = vrot.lane.b32.xlu0 %v1217, 28
    %v1223 = vpop.permute.xlu0 %1222
    %vm1226 = vcmask 359648
    %1227 = vst.msk [vmem:[#allocation33] sm:$0xff] %vm1226, %v1221
    %vm1228 = vcmask 352480
    %1229 = vst.msk [vmem:[#allocation33 + $0x8] sm:$0x1] %vm1228, %v1223
    %s1230 = sld [smem:[#allocation8 + $0x2]]
    %v1231 = vpack.c.bf16 %v1217, %v1216
    %v1232 = vld [vmem:[#allocation27] sm:$0xff]
    %v1233 = vld [vmem:[#allocation28] sm:$0x1]
    %v1235 = vlaneseq
    %v1236 = vshrl.u32 %v1235, 7
    %v1237 = vsub.s32 0, %v1236
    %v1238 = vrot.slane %v1233, %v1237
    %1240 = vmatprep.subr.mxu0 0.0
    %1241 = vmatpush1.msra.mxu0 0.0
    %1242 = vmatprep.subr.mxu0 0.0
    %1243 = vmatpush1.msra.mxu0 0.0
    %1244 = vmatprep.subr.mxu0 0.0
    %1245 = vmatpush1.msra.mxu0 0.0
    %1246 = vmatprep.subr.mxu0 0.0
    %1247 = vmatpush1.msra.mxu0 0.0
    %1248 = vmatprep.subr.mxu0 0.0
    %1249 = vmatpush1.msra.mxu0 0.0
    %1250 = vmatprep.subr.mxu0 0.0
    %1251 = vmatpush1.msra.mxu0 0.0
    %1252 = vmatprep.subr.mxu0 0.0
    %1253 = vmatpush1.msra.mxu0 0.0
    %1254 = vmatprep.subr.mxu0 0.0
    %1255 = vmatpush1.msra.mxu0 0.0
    %1256 = vmatprep.subr.mxu0 0.0
    %1257 = vmatpush1.msra.mxu0 0.0
    %1258 = vmatprep.subr.mxu0 0.0
    %1259 = vmatpush1.msra.mxu0 0.0
    %1260 = vmatprep.subr.mxu0 0.0
    %1261 = vmatpush1.msra.mxu0 0.0
    %1262 = vmatprep.subr.mxu0 0.0
    %1263 = vmatpush1.msra.mxu0 0.0
    %1264 = vmatprep.subr.mxu0 0.0
    %1265 = vmatpush1.msra.mxu0 0.0
    %1266 = vmatprep.subr.mxu0 0.0
    %1267 = vmatpush1.msra.mxu0 0.0
    %1268 = vmatprep.subr.mxu0 0.0
    %1269 = vmatpush1.msra.mxu0 0.0
    %1270 = vmatprep.subr.mxu0 0.0
    %1271 = vmatpush1.msra.mxu0 %v1232
    %1272 = vmatprep.subr.mxu0 0.0
    %1273 = vmatpush2.msra.mxu0 0.0
    %1274 = vmatprep.subr.mxu0 0.0
    %1275 = vmatpush2.msra.mxu0 0.0
    %1276 = vmatprep.subr.mxu0 0.0
    %1277 = vmatpush2.msra.mxu0 0.0
    %1278 = vmatprep.subr.mxu0 0.0
    %1279 = vmatpush2.msra.mxu0 0.0
    %1280 = vmatprep.subr.mxu0 0.0
    %1281 = vmatpush2.msra.mxu0 0.0
    %1282 = vmatprep.subr.mxu0 0.0
    %1283 = vmatpush2.msra.mxu0 0.0
    %1284 = vmatprep.subr.mxu0 0.0
    %1285 = vmatpush2.msra.mxu0 0.0
    %1286 = vmatprep.subr.mxu0 0.0
    %1287 = vmatpush2.msra.mxu0 0.0
    %1288 = vmatprep.subr.mxu0 0.0
    %1289 = vmatpush2.msra.mxu0 0.0
    %1290 = vmatprep.subr.mxu0 0.0
    %1291 = vmatpush2.msra.mxu0 0.0
    %1292 = vmatprep.subr.mxu0 0.0
    %1293 = vmatpush2.msra.mxu0 0.0
    %1294 = vmatprep.subr.mxu0 0.0
    %1295 = vmatpush2.msra.mxu0 0.0
    %1296 = vmatprep.subr.mxu0 0.0
    %1297 = vmatpush2.msra.mxu0 0.0
    %1298 = vmatprep.subr.mxu0 0.0
    %1299 = vmatpush2.msra.mxu0 0.0
    %1300 = vmatprep.subr.mxu0 0.0
    %1301 = vmatpush2.msra.mxu0 0.0
    %1302 = vmatprep.subr.mxu0 0.0
    %1303 = vmatpush2.msra.mxu0 0.0
    %1304 = vmatprep.mubr.f32.mxu0 0.0
    %1305 = vmatmul.mubr.f32.gmra.mxu0 %v337
    %v1306 = vpop.f32.mrf.mxu0
    %v1307 = vadd.f32 %v1238, %v1306
    %v1308 = vpop.f32.mrf.mxu0
    %1309 = vmatprep.mubr.f32.mxu0 0.0
    %1310 = vmatmul.mubr.f32.gmra.mxu0 %v340
    %v1311 = vpop.f32.mrf.mxu0
    %v1312 = vadd.f32 %v1238, %v1311
    %v1313 = vpop.f32.mrf.mxu0
    %1314 = vdwg.mxu0
    %v1316 = vand.u32 %v1231, %v429
    %1318 = vmatprep.subr.bf16.mxu0 0
    %1319 = vmatpush1.bf16.msra.mxu0 0
    %1320 = vmatprep.subr.bf16.mxu0 0
    %1321 = vmatpush1.bf16.msra.mxu0 0
    %1322 = vmatprep.subr.bf16.mxu0 0
    %1323 = vmatpush1.bf16.msra.mxu0 0
    %1324 = vmatprep.subr.bf16.mxu0 0
    %1325 = vmatpush1.bf16.msra.mxu0 0
    %1326 = vmatprep.subr.bf16.mxu0 0
    %1327 = vmatpush1.bf16.msra.mxu0 0
    %1328 = vmatprep.subr.bf16.mxu0 0
    %1329 = vmatpush1.bf16.msra.mxu0 0
    %1330 = vmatprep.subr.bf16.mxu0 0
    %1331 = vmatpush1.bf16.msra.mxu0 0
    %1332 = vmatprep.subr.bf16.mxu0 0
    %1333 = vmatpush1.bf16.msra.mxu0 %v1316
    %1334 = vmatprep.subr.bf16.mxu0 0
    %1335 = vmatpush2.bf16.msra.mxu0 0
    %1336 = vmatprep.subr.bf16.mxu0 0
    %1337 = vmatpush2.bf16.msra.mxu0 0
    %1338 = vmatprep.subr.bf16.mxu0 0
    %1339 = vmatpush2.bf16.msra.mxu0 0
    %1340 = vmatprep.subr.bf16.mxu0 0
    %1341 = vmatpush2.bf16.msra.mxu0 0
    %1342 = vmatprep.subr.bf16.mxu0 0
    %1343 = vmatpush2.bf16.msra.mxu0 0
    %1344 = vmatprep.subr.bf16.mxu0 0
    %1345 = vmatpush2.bf16.msra.mxu0 0
    %1346 = vmatprep.subr.bf16.mxu0 0
    %1347 = vmatpush2.bf16.msra.mxu0 0
    %1348 = vmatprep.subr.bf16.mxu0 0
    %1349 = vmatpush2.bf16.msra.mxu0 0
    %1350 = vmatprep.mubr.bf16.mxu0 0
    %1351 = vmatmul.mubr.bf16.gmra.mxu0 %v424
    %v1352 = vpop.f32.mrf.mxu0
    %v1353 = vadd.f32 %v1307, %v1352
    %v1354 = vpop.f32.mrf.mxu0
    %v1355 = vpop.f32.mrf.mxu0
    %v1356 = vadd.f32 %v1312, %v1355
    %v1357 = vpop.f32.mrf.mxu0
    %1358 = vdwg.mxu0
    %v1359 = vmax.f32 %v1353, 0.0
    %v1360 = vmax.f32 %v1356, 0.0
    %v1361 = vpack.c.bf16 %v1360, %v1359
    %v1363 = vsel %vm502, %v1361, 0
    %1365 = vmatprep.subr.bf16.mxu0 0
    %1366 = vmatpush1.bf16.msra.mxu0 0
    %1367 = vmatprep.subr.bf16.mxu0 0
    %1368 = vmatpush1.bf16.msra.mxu0 0
    %1369 = vmatprep.subr.bf16.mxu0 0
    %1370 = vmatpush1.bf16.msra.mxu0 0
    %1371 = vmatprep.subr.bf16.mxu0 0
    %1372 = vmatpush1.bf16.msra.mxu0 0
    %1373 = vmatprep.subr.bf16.mxu0 0
    %1374 = vmatpush1.bf16.msra.mxu0 0
    %1375 = vmatprep.subr.bf16.mxu0 0
    %1376 = vmatpush1.bf16.msra.mxu0 0
    %1377 = vmatprep.subr.bf16.mxu0 0
    %1378 = vmatpush1.bf16.msra.mxu0 0
    %1379 = vmatprep.subr.bf16.mxu0 0
    %1380 = vmatpush1.bf16.msra.mxu0 %v1363
    %1381 = vmatprep.subr.bf16.mxu0 0
    %1382 = vmatpush2.bf16.msra.mxu0 0
    %1383 = vmatprep.subr.bf16.mxu0 0
    %1384 = vmatpush2.bf16.msra.mxu0 0
    %1385 = vmatprep.subr.bf16.mxu0 0
    %1386 = vmatpush2.bf16.msra.mxu0 0
    %1387 = vmatprep.subr.bf16.mxu0 0
    %1388 = vmatpush2.bf16.msra.mxu0 0
    %1389 = vmatprep.subr.bf16.mxu0 0
    %1390 = vmatpush2.bf16.msra.mxu0 0
    %1391 = vmatprep.subr.bf16.mxu0 0
    %1392 = vmatpush2.bf16.msra.mxu0 0
    %1393 = vmatprep.subr.bf16.mxu0 0
    %1394 = vmatpush2.bf16.msra.mxu0 0
    %1395 = vmatprep.subr.bf16.mxu0 0
    %1396 = vmatpush2.bf16.msra.mxu0 0
    %1397 = vmatprep.mubr.bf16.mxu0 0
    %1398 = vmatmul.mubr.bf16.gmra.mxu0 %v500
    %v1399 = vpop.f32.mrf.mxu0
    %v1400 = vadd.f32 0.0, %v1399
    %v1401 = vpop.f32.mrf.mxu0
    %v1402 = vpop.f32.mrf.mxu0
    %v1403 = vadd.f32 0.0, %v1402
    %v1404 = vpop.f32.mrf.mxu0
    %1405 = vdwg.mxu0
    %v1406 = vadd.f32 %v1216, %v1400
    %v1407 = vadd.f32 %v1217, %v1403
    %v1408 = vld [vmem:[#allocation30] sm:$0xff]
    %v1409 = vld [vmem:[#allocation30 + $0x8] sm:$0xff]
    %v1410 = vld [vmem:[#allocation31] sm:$0x1]
    %v1412 = vlaneseq
    %v1413 = vshrl.u32 %v1412, 7
    %v1414 = vsub.s32 0, %v1413
    %v1415 = vrot.slane %v1410, %v1414
    %v1418 = vsel %vm653, %v1406, 0
    %v1421 = vsel %vm653, %v1407, 0
    %1423 = vmatprep.subr.mxu0 0.0
    %1424 = vmatpush1.msra.mxu0 0.0
    %1425 = vmatprep.subr.mxu0 0.0
    %1426 = vmatpush1.msra.mxu0 0.0
    %1427 = vmatprep.subr.mxu0 0.0
    %1428 = vmatpush1.msra.mxu0 0.0
    %1429 = vmatprep.subr.mxu0 0.0
    %1430 = vmatpush1.msra.mxu0 0.0
    %1431 = vmatprep.subr.mxu0 0.0
    %1432 = vmatpush1.msra.mxu0 0.0
    %1433 = vmatprep.subr.mxu0 0.0
    %1434 = vmatpush1.msra.mxu0 0.0
    %1435 = vmatprep.subr.mxu0 0.0
    %1436 = vmatpush1.msra.mxu0 0.0
    %1437 = vmatprep.subr.mxu0 0.0
    %1438 = vmatpush1.msra.mxu0 0.0
    %1439 = vmatprep.subr.mxu0 0.0
    %1440 = vmatpush1.msra.mxu0 0.0
    %1441 = vmatprep.subr.mxu0 0.0
    %1442 = vmatpush1.msra.mxu0 0.0
    %1443 = vmatprep.subr.mxu0 0.0
    %1444 = vmatpush1.msra.mxu0 0.0
    %1445 = vmatprep.subr.mxu0 0.0
    %1446 = vmatpush1.msra.mxu0 0.0
    %1447 = vmatprep.subr.mxu0 0.0
    %1448 = vmatpush1.msra.mxu0 0.0
    %1449 = vmatprep.subr.mxu0 0.0
    %1450 = vmatpush1.msra.mxu0 0.0
    %1451 = vmatprep.subr.mxu0 0.0
    %1452 = vmatpush1.msra.mxu0 %v1409
    %1453 = vmatprep.subr.mxu0 0.0
    %1454 = vmatpush1.msra.mxu0 %v1408
    %1455 = vmatprep.subr.mxu0 0.0
    %1456 = vmatpush2.msra.mxu0 0.0
    %1457 = vmatprep.subr.mxu0 0.0
    %1458 = vmatpush2.msra.mxu0 0.0
    %1459 = vmatprep.subr.mxu0 0.0
    %1460 = vmatpush2.msra.mxu0 0.0
    %1461 = vmatprep.subr.mxu0 0.0
    %1462 = vmatpush2.msra.mxu0 0.0
    %1463 = vmatprep.subr.mxu0 0.0
    %1464 = vmatpush2.msra.mxu0 0.0
    %1465 = vmatprep.subr.mxu0 0.0
    %1466 = vmatpush2.msra.mxu0 0.0
    %1467 = vmatprep.subr.mxu0 0.0
    %1468 = vmatpush2.msra.mxu0 0.0
    %1469 = vmatprep.subr.mxu0 0.0
    %1470 = vmatpush2.msra.mxu0 0.0
    %1471 = vmatprep.subr.mxu0 0.0
    %1472 = vmatpush2.msra.mxu0 0.0
    %1473 = vmatprep.subr.mxu0 0.0
    %1474 = vmatpush2.msra.mxu0 0.0
    %1475 = vmatprep.subr.mxu0 0.0
    %1476 = vmatpush2.msra.mxu0 0.0
    %1477 = vmatprep.subr.mxu0 0.0
    %1478 = vmatpush2.msra.mxu0 0.0
    %1479 = vmatprep.subr.mxu0 0.0
    %1480 = vmatpush2.msra.mxu0 0.0
    %1481 = vmatprep.subr.mxu0 0.0
    %1482 = vmatpush2.msra.mxu0 0.0
    %1483 = vmatprep.subr.mxu0 0.0
    %1484 = vmatpush2.msra.mxu0 0.0
    %1485 = vmatprep.subr.mxu0 0.0
    %1486 = vmatpush2.msra.mxu0 0.0
    %1487 = vmatprep.mubr.f32.mxu0 0.0
    %1488 = vmatmul.mubr.f32.gmra.mxu0 %v1418
    %v1489 = vpop.f32.mrf.mxu0
    %v1490 = vadd.f32 %v1415, %v1489
    %v1491 = vpop.f32.mrf.mxu0
    %1492 = vmatprep.mubr.f32.mxu0 0.0
    %1493 = vmatmul.mubr.f32.gmra.mxu0 %v1421
    %v1494 = vpop.f32.mrf.mxu0
    %v1495 = vadd.f32 %v1415, %v1494
    %v1496 = vpop.f32.mrf.mxu0
    %1497 = vdwg.mxu0
    %v1498 = vmax.f32 %v1490, 0.0
    %v1499 = vmax.f32 %v1495, 0.0
    %v1500 = vld [vmem:[%s23] sm:$0xff]
    %v1501 = vld [vmem:[%s23 + $0x8] sm:$0xff]
    %v1502 = vld [vmem:[%s24] sm:$0x1]
    %v1504 = vlaneseq
    %v1505 = vshrl.u32 %v1504, 7
    %v1506 = vsub.s32 0, %v1505
    %v1507 = vrot.slane %v1502, %v1506
    %v1510 = vsel %vm653, %v1498, 0
    %v1513 = vsel %vm653, %v1499, 0
    %1515 = vmatprep.subr.mxu0 0.0
    %1516 = vmatpush1.msra.mxu0 0.0
    %1517 = vmatprep.subr.mxu0 0.0
    %1518 = vmatpush1.msra.mxu0 0.0
    %1519 = vmatprep.subr.mxu0 0.0
    %1520 = vmatpush1.msra.mxu0 0.0
    %1521 = vmatprep.subr.mxu0 0.0
    %1522 = vmatpush1.msra.mxu0 0.0
    %1523 = vmatprep.subr.mxu0 0.0
    %1524 = vmatpush1.msra.mxu0 0.0
    %1525 = vmatprep.subr.mxu0 0.0
    %1526 = vmatpush1.msra.mxu0 0.0
    %1527 = vmatprep.subr.mxu0 0.0
    %1528 = vmatpush1.msra.mxu0 0.0
    %1529 = vmatprep.subr.mxu0 0.0
    %1530 = vmatpush1.msra.mxu0 0.0
    %1531 = vmatprep.subr.mxu0 0.0
    %1532 = vmatpush1.msra.mxu0 0.0
    %1533 = vmatprep.subr.mxu0 0.0
    %1534 = vmatpush1.msra.mxu0 0.0
    %1535 = vmatprep.subr.mxu0 0.0
    %1536 = vmatpush1.msra.mxu0 0.0
    %1537 = vmatprep.subr.mxu0 0.0
    %1538 = vmatpush1.msra.mxu0 0.0
    %1539 = vmatprep.subr.mxu0 0.0
    %1540 = vmatpush1.msra.mxu0 0.0
    %1541 = vmatprep.subr.mxu0 0.0
    %1542 = vmatpush1.msra.mxu0 0.0
    %1543 = vmatprep.subr.mxu0 0.0
    %1544 = vmatpush1.msra.mxu0 %v1501
    %1545 = vmatprep.subr.mxu0 0.0
    %1546 = vmatpush1.msra.mxu0 %v1500
    %1547 = vmatprep.subr.mxu0 0.0
    %1548 = vmatpush2.msra.mxu0 0.0
    %1549 = vmatprep.subr.mxu0 0.0
    %1550 = vmatpush2.msra.mxu0 0.0
    %1551 = vmatprep.subr.mxu0 0.0
    %1552 = vmatpush2.msra.mxu0 0.0
    %1553 = vmatprep.subr.mxu0 0.0
    %1554 = vmatpush2.msra.mxu0 0.0
    %1555 = vmatprep.subr.mxu0 0.0
    %1556 = vmatpush2.msra.mxu0 0.0
    %1557 = vmatprep.subr.mxu0 0.0
    %1558 = vmatpush2.msra.mxu0 0.0
    %1559 = vmatprep.subr.mxu0 0.0
    %1560 = vmatpush2.msra.mxu0 0.0
    %1561 = vmatprep.subr.mxu0 0.0
    %1562 = vmatpush2.msra.mxu0 0.0
    %1563 = vmatprep.subr.mxu0 0.0
    %1564 = vmatpush2.msra.mxu0 0.0
    %1565 = vmatprep.subr.mxu0 0.0
    %1566 = vmatpush2.msra.mxu0 0.0
    %1567 = vmatprep.subr.mxu0 0.0
    %1568 = vmatpush2.msra.mxu0 0.0
    %1569 = vmatprep.subr.mxu0 0.0
    %1570 = vmatpush2.msra.mxu0 0.0
    %1571 = vmatprep.subr.mxu0 0.0
    %1572 = vmatpush2.msra.mxu0 0.0
    %1573 = vmatprep.subr.mxu0 0.0
    %1574 = vmatpush2.msra.mxu0 0.0
    %1575 = vmatprep.subr.mxu0 0.0
    %1576 = vmatpush2.msra.mxu0 0.0
    %1577 = vmatprep.subr.mxu0 0.0
    %1578 = vmatpush2.msra.mxu0 0.0
    %1579 = vmatprep.mubr.f32.mxu0 0.0
    %1580 = vmatmul.mubr.f32.gmra.mxu0 %v1510
    %v1581 = vpop.f32.mrf.mxu0
    %v1582 = vadd.f32 %v1507, %v1581
    %v1583 = vpop.f32.mrf.mxu0
    %1584 = vmatprep.mubr.f32.mxu0 0.0
    %1585 = vmatmul.mubr.f32.gmra.mxu0 %v1513
    %v1586 = vpop.f32.mrf.mxu0
    %v1587 = vadd.f32 %v1507, %v1586
    %v1588 = vpop.f32.mrf.mxu0
    %1589 = vdwg.mxu0
    %v1590 = vstv %s1230
    %v1591 = vmul.f32 %v1590, %v1216
    %v1592 = vmul.f32 %v1590, %v1217
    %s1593 = ssub.f32 1.0, %s1230
    %v1594 = vstv %s1593
    %v1595 = vmul.f32 %v1594, %v1582
    %v1596 = vmul.f32 %v1594, %v1587
    %v1597 = vadd.f32 %v1591, %v1595
    %v1598 = vadd.f32 %v1592, %v1596
    %1601 = vrot.lane.b32.xlu0 %v1597, 44
    %v1602 = vpop.permute.xlu0 %1601
    %1603 = vrot.lane.b32.xlu0 %v1598, 44
    %v1604 = vpop.permute.xlu0 %1603
    %vm1607 = vcmask 490848
    %1608 = vst.msk [vmem:[#allocation33] sm:$0xff] %vm1607, %v1602
    %vm1609 = vcmask 483680
    %1610 = vst.msk [vmem:[#allocation33 + $0x8] sm:$0x1] %vm1609, %v1604
    // Predicated region
    $region178: #{tpu_custom_call.1} parent=1 // pred_check
      _
    $region179: #{tpu_custom_call.1} parent=1 // pred_check_branch
      %1612 = sbr.rel (0) target = $region181
    $region180: #{tpu_custom_call.1} parent=1 // pred_region
      %s1614 = ssub.s32 256, 256
      %1615 = vsyncadd [#allocation4], %s1614
      %s1616 = sshll.u32 [#allocation33], 4
      %s1617 = int_to_ptr.vmem [resolvable:$true] %s1616
      %1622 = dma.vmem_to_hbm [thread:$0]  %s1617, 256, %s25, [#allocation4], 128, 128, 8
    $region181: #{tpu_custom_call.1} parent=1 // pred_fallthru
      _
    // Predicated region
    $region182: #{tpu_custom_call.1} parent=1 // pred_check
      _
    $region183: #{tpu_custom_call.1} parent=1 // pred_check_branch
      %1624 = sbr.rel (0) target = $region185
    $region184: #{tpu_custom_call.1} parent=1 // pred_region
      %1625 = dma.done [#allocation4], 256
    $region185: #{tpu_custom_call.1} parent=1 // pred_fallthru
      _
    %1626 = vsyncpa [#allocation3], 1
    %1627 = vsyncpa [#allocation7], 1
    %1628 = vsyncpa [#allocation11], 1
    %1629 = vsyncpa [#allocation14], 1
    %1630 = vsyncpa [#allocation17], 1
    %1631 = vsyncpa [#allocation20], 1
    %1632 = vsyncpa [#allocation23], 1
    %1633 = vsyncpa [#allocation26], 1
    %1634 = vsyncpa [#allocation29], 1
    %1635 = vsyncpa [#allocation32], 1
    %1636 = vsyncpa [#allocation4], 1
    %1637 = vsyncpa [#allocation5], 1

</llo_original>
